<compile_context>
chip_gen: v6e
topology: v6e:2x2x1
jax: 0.10.0
libtpu: 0.0.40
codegen_flags: <defaults>
</compile_context>

<pallas_src>
import functools

import jax
import jax.numpy as jnp
from jax.experimental import pallas as pl
from jax.experimental.pallas import tpu as pltpu


# ----------------------------------------------------------------------------- kernel

def _fused_mlp_t(x, w1t, b1, w2t, b2, w3t, b3):
    """Packed, transposed 3-layer MLP.

    x    : (D, T)        batch on lanes
    w1t  : (128, D), w2t : (128, 128), w3t : (2, 128)   (possibly bf16)
    b1,b2: (128, 1), b3  : (2, 1)                       (f32)
    returns (2, T) f32:  row 0 = g(x)^T, row 1 = h(x)^T
    """
    cd = w1t.dtype
    h1 = jnp.maximum(
        jnp.dot(w1t, x.astype(cd), preferred_element_type=jnp.float32) + b1, 0.0)
    h2 = jnp.maximum(
        jnp.dot(w2t, h1.astype(cd), preferred_element_type=jnp.float32) + b2, 0.0)
    return jnp.dot(w3t, h2.astype(cd), preferred_element_type=jnp.float32) + b3


def airl_disc_kernel(gamma,
                     s_ref, ns_ref, dones_ref, logpi_ref,
                     w1_ref, b1_ref, w2_ref, b2_ref, w3_ref, b3_ref,
                     out_ref):
    w1, b1 = w1_ref[...], b1_ref[...]
    w2, b2 = w2_ref[...], b2_ref[...]
    w3, b3 = w3_ref[...], b3_ref[...]

    z_s = _fused_mlp_t(s_ref[...], w1, b1, w2, b2, w3, b3)    # (2, T): [g(s); h(s)]
    z_ns = _fused_mlp_t(ns_ref[...], w1, b1, w2, b2, w3, b3)  # (2, T): [g(s'); h(s')]

    rs = z_s[0:1, :]      # g(s)     (1, T)
    vs = z_s[1:2, :]      # h(s)     (1, T)
    nvs = z_ns[1:2, :]    # h(s')    (1, T)

    # f(s, s') = g(s) + gamma * (1 - done) * h(s') - h(s);  output = f - log_pi
    f = rs + gamma * (1.0 - dones_ref[...]) * nvs - vs
    out_ref[...] = (f - logpi_ref[...]).astype(out_ref.dtype)


# ----------------------------------------------------------------------------- wrapper

def _pack_params(params, compute_dtype):
    """Fuse the g/h networks into one 128-wide packed (transposed) MLP."""
    gw1, gb1 = params["gw1"], params["gb1"]
    gw2, gb2 = params["gw2"], params["gb2"]
    gw3, gb3 = params["gw3"], params["gb3"]
    hw1, hb1 = params["hw1"], params["hb1"]
    hw2, hb2 = params["hw2"], params["hb2"]
    hw3, hb3 = params["hw3"], params["hb3"]

    hg1, hh1 = gw1.shape[1], hw1.shape[1]
    hg2, hh2 = gw2.shape[1], hw2.shape[1]

    w1t = jnp.concatenate([gw1, hw1], axis=1).T               # (hg1+hh1, D)
    b1c = jnp.concatenate([gb1, hb1], axis=1).T               # (hg1+hh1, 1)

    w2 = jnp.zeros((hg1 + hh1, hg2 + hh2), jnp.float32)
    w2 = w2.at[:hg1, :hg2].set(gw2)
    w2 = w2.at[hg1:, hg2:].set(hw2)
    w2t = w2.T                                                # (hg2+hh2, hg1+hh1)
    b2c = jnp.concatenate([gb2, hb2], axis=1).T               # (hg2+hh2, 1)

    w3 = jnp.zeros((hg2 + hh2, 2), jnp.float32)
    w3 = w3.at[:hg2, 0:1].set(gw3)
    w3 = w3.at[hg2:, 1:2].set(hw3)
    w3t = w3.T                                                # (2, hg2+hh2)
    b3c = jnp.concatenate([gb3, hb3], axis=1).T               # (2, 1)

    return (w1t.astype(compute_dtype), b1c,
            w2t.astype(compute_dtype), b2c,
            w3t.astype(compute_dtype), b3c)


def airl_discrim_forward(states, dones, log_pis, next_states, params, gamma,
                         *, batch_tile=None, compute_dtype=jnp.float32):
    """AIRLDiscrim.forward: returns f(s, s') - log_pi, shape (B, 1)."""
    B, D = states.shape
    gamma = float(gamma)  # fixed hyperparameter -> trace-time constant

    if batch_tile is None:
        batch_tile = B                      # tiny batch: single grid step
        for cand in (512, 256, 128):
            if B % cand == 0 and B // cand >= 2:
                batch_tile = cand           # lane-dense tile, >=2 parallel steps
                break
    assert B % batch_tile == 0, "batch must be divisible by batch_tile"
    num_tiles = B // batch_tile

    # Lane-dense, batch-on-lanes layout (layout plumbing done by XLA outside).
    states_t = states.T                     # (D, B)
    next_states_t = next_states.T           # (D, B)
    dones_row = dones.reshape(1, B)
    log_pis_row = log_pis.reshape(1, B)

    w1t, b1c, w2t, b2c, w3t, b3c = _pack_params(params, compute_dtype)
    param_list = [w1t, b1c, w2t, b2c, w3t, b3c]

    def lane_spec(rows):
        return pl.BlockSpec((rows, batch_tile), lambda i: (0, i))

    def param_spec(p):
        # full parameter resident every grid step (constant index map -> no re-DMA)
        return pl.BlockSpec(p.shape, lambda i: (0, 0))

    in_specs = [
        lane_spec(D),   # states^T
        lane_spec(D),   # next_states^T
        lane_spec(1),   # dones (row)
        lane_spec(1),   # log_pis (row)
    ] + [param_spec(p) for p in param_list]

    out_row = pl.pallas_call(
        functools.partial(airl_disc_kernel, gamma),
        out_shape=jax.ShapeDtypeStruct((1, B), jnp.float32),
        grid=(num_tiles,),
        in_specs=in_specs,
        out_specs=lane_spec(1),
        compiler_params=pltpu.CompilerParams(
            dimension_semantics=("parallel",)),
    )(states_t, next_states_t, dones_row, log_pis_row, *param_list)

    return out_row.reshape(B, 1)


# ----------------------------------------------------------------------------- reference + params

def _mlp3_ref(x, w1, b1, w2, b2, w3, b3):
    h = jnp.maximum(x @ w1 + b1, 0.0)
    h = jnp.maximum(h @ w2 + b2, 0.0)
    return h @ w3 + b3


def reference_forward(states, dones, log_pis, next_states, p, gamma):
    rs = _mlp3_ref(states, p["gw1"], p["gb1"], p["gw2"], p["gb2"], p["gw3"], p["gb3"])
    vs = _mlp3_ref(states, p["hw1"], p["hb1"], p["hw2"], p["hb2"], p["hw3"], p["hb3"])
    nvs = _mlp3_ref(next_states, p["hw1"], p["hb1"], p["hw2"], p["hb2"], p["hw3"], p["hb3"])
    return rs + gamma * (1.0 - dones) * nvs - vs - log_pis


def init_params(key, state_dim, hidden_r=(64, 64), hidden_v=(64, 64)):
    """Deterministic synthetic parameters matching AIRLDiscrim.__init__ shapes."""
    ks = jax.random.split(key, 12)

    def lin(k, fan_in, fan_out):
        return 0.1 * jax.random.normal(k, (fan_in, fan_out), jnp.float32)

    return {
        # g network: D -> 64 -> 64 -> 1
        "gw1": lin(ks[0], state_dim, hidden_r[0]),
        "gb1": 0.01 * jax.random.normal(ks[1], (1, hidden_r[0]), jnp.float32),
        "gw2": lin(ks[2], hidden_r[0], hidden_r[1]),
        "gb2": 0.01 * jax.random.normal(ks[3], (1, hidden_r[1]), jnp.float32),
        "gw3": lin(ks[4], hidden_r[1], 1),
        "gb3": 0.01 * jax.random.normal(ks[5], (1, 1), jnp.float32),
        # h network: D -> 64 -> 64 -> 1
        "hw1": lin(ks[6], state_dim, hidden_v[0]),
        "hb1": 0.01 * jax.random.normal(ks[7], (1, hidden_v[0]), jnp.float32),
        "hw2": lin(ks[8], hidden_v[0], hidden_v[1]),
        "hb2": 0.01 * jax.random.normal(ks[9], (1, hidden_v[1]), jnp.float32),
        "hw3": lin(ks[10], hidden_v[1], 1),
        "hb3": 0.01 * jax.random.normal(ks[11], (1, 1), jnp.float32),
    }


def _make_inputs(key, B, D):
    k_s, k_ns, k_d, k_lp = jax.random.split(key, 4)
    states = jax.random.normal(k_s, (B, D), jnp.float32)
    next_states = jax.random.normal(k_ns, (B, D), jnp.float32)
    dones = (jax.random.uniform(k_d, (B, 1)) < 0.3).astype(jnp.float32)
    log_pis = -jax.random.uniform(k_lp, (B, 1), jnp.float32)
    return states, dones, log_pis, next_states


if __name__ == "__main__":
    D = 32          # state_shape[0]
    gamma = 0.99

    key = jax.random.PRNGKey(0)
    k_params, k_in1, k_in2 = jax.random.split(key, 3)
    params = init_params(k_params, D)

    # Case 1: tiled batch (exercises lane-dense 128-wide tiles + 2 grid steps).
    B1 = 256
    s, d, lp, ns = _make_inputs(k_in1, B1, D)
    out1 = jax.block_until_ready(
        airl_discrim_forward(s, d, lp, ns, params, gamma))
    ref1 = reference_forward(s, d, lp, ns, params, gamma)
    assert out1.shape == (B1, 1)
    assert jnp.allclose(out1, ref1, atol=1e-4, rtol=1e-4), "mismatch (tiled case)"

    # Case 2: tiny batch -> whole problem in a single grid step.
    B2 = 8
    s2, d2, lp2, ns2 = _make_inputs(k_in2, B2, D)
    out2 = jax.block_until_ready(
        airl_discrim_forward(s2, d2, lp2, ns2, params, gamma))
    ref2 = reference_forward(s2, d2, lp2, ns2, params, gamma)
    assert out2.shape == (B2, 1)
    assert jnp.allclose(out2, ref2, atol=1e-4, rtol=1e-4), "mismatch (tiny case)"

    print("KERNEL_OK")
</pallas_src>

<mosaic_0001>
module attributes {stable_mosaic.version = 11 : i64} {
  func.func @airl_disc_kernel(%arg0: i32, %arg1: memref<32x128xf32, #tpu.memory_space<vmem>>, %arg2: memref<32x128xf32, #tpu.memory_space<vmem>>, %arg3: memref<1x128xf32, #tpu.memory_space<vmem>>, %arg4: memref<1x128xf32, #tpu.memory_space<vmem>>, %arg5: memref<128x32xf32, #tpu.memory_space<vmem>>, %arg6: memref<128x1xf32, #tpu.memory_space<vmem>>, %arg7: memref<128x128xf32, #tpu.memory_space<vmem>>, %arg8: memref<128x1xf32, #tpu.memory_space<vmem>>, %arg9: memref<2x128xf32, #tpu.memory_space<vmem>>, %arg10: memref<2x1xf32, #tpu.memory_space<vmem>>, %arg11: memref<1x128xf32, #tpu.memory_space<vmem>>) attributes {dimension_semantics = [#tpu.dimension_semantics<parallel>], iteration_bounds = array<i64: 2>, scalar_prefetch = 0 : i64, scratch_operands = 0 : i64, tpu.core_type = #tpu.core_type<tc>, window_params = [{transform_indices = @transform_0, window_bounds = array<i64: 32, 128>}, {transform_indices = @transform_1, window_bounds = array<i64: 32, 128>}, {transform_indices = @transform_2, window_bounds = array<i64: 1, 128>}, {transform_indices = @transform_3, window_bounds = array<i64: 1, 128>}, {pipeline_mode = #tpu.pipeline_mode<synchronous>, transform_indices = @transform_4, window_bounds = array<i64: 128, 32>}, {pipeline_mode = #tpu.pipeline_mode<synchronous>, transform_indices = @transform_5, window_bounds = array<i64: 128, 1>}, {pipeline_mode = #tpu.pipeline_mode<synchronous>, transform_indices = @transform_6, window_bounds = array<i64: 128, 128>}, {pipeline_mode = #tpu.pipeline_mode<synchronous>, transform_indices = @transform_7, window_bounds = array<i64: 128, 1>}, {pipeline_mode = #tpu.pipeline_mode<synchronous>, transform_indices = @transform_8, window_bounds = array<i64: 2, 128>}, {pipeline_mode = #tpu.pipeline_mode<synchronous>, transform_indices = @transform_9, window_bounds = array<i64: 2, 1>}, {transform_indices = @transform_10, window_bounds = array<i64: 1, 128>}]} {
    %c0 = arith.constant 0 : index
    %c0_0 = arith.constant 0 : index
    %0 = vector.load %arg5[%c0, %c0_0] : memref<128x32xf32, #tpu.memory_space<vmem>>, vector<128x32xf32>
    %c0_1 = arith.constant 0 : index
    %c0_2 = arith.constant 0 : index
    %1 = vector.load %arg6[%c0_1, %c0_2] : memref<128x1xf32, #tpu.memory_space<vmem>>, vector<128x1xf32>
    %c0_3 = arith.constant 0 : index
    %c0_4 = arith.constant 0 : index
    %2 = vector.load %arg7[%c0_3, %c0_4] : memref<128x128xf32, #tpu.memory_space<vmem>>, vector<128x128xf32>
    %c0_5 = arith.constant 0 : index
    %c0_6 = arith.constant 0 : index
    %3 = vector.load %arg8[%c0_5, %c0_6] : memref<128x1xf32, #tpu.memory_space<vmem>>, vector<128x1xf32>
    %c0_7 = arith.constant 0 : index
    %c0_8 = arith.constant 0 : index
    %4 = vector.load %arg9[%c0_7, %c0_8] : memref<2x128xf32, #tpu.memory_space<vmem>>, vector<2x128xf32>
    %c0_9 = arith.constant 0 : index
    %c0_10 = arith.constant 0 : index
    %5 = vector.load %arg10[%c0_9, %c0_10] : memref<2x1xf32, #tpu.memory_space<vmem>>, vector<2x1xf32>
    %c0_11 = arith.constant 0 : index
    %c0_12 = arith.constant 0 : index
    %6 = vector.load %arg1[%c0_11, %c0_12] : memref<32x128xf32, #tpu.memory_space<vmem>>, vector<32x128xf32>
    %cst = arith.constant dense<0.000000e+00> : vector<128x128xf32>
    %7 = tpu.matmul %0, %6, %cst {dimension_numbers = #tpu.dot_dimension_numbers<[1], [0], [0], [1], [0, 0, 1, 1], [], []>} : vector<128x32xf32>, vector<32x128xf32>, vector<128x128xf32> -> vector<128x128xf32>
    %8 = vector.broadcast %1 : vector<128x1xf32> to vector<128x128xf32>
    %9 = arith.addf %7, %8 : vector<128x128xf32>
    %cst_13 = arith.constant 0.000000e+00 : f32
    %10 = vector.broadcast %cst_13 : f32 to vector<128x128xf32>
    %11 = arith.maximumf %9, %10 : vector<128x128xf32>
    %cst_14 = arith.constant dense<0.000000e+00> : vector<128x128xf32>
    %12 = tpu.matmul %2, %11, %cst_14 {dimension_numbers = #tpu.dot_dimension_numbers<[1], [0], [0], [1], [0, 0, 1, 1], [], []>} : vector<128x128xf32>, vector<128x128xf32>, vector<128x128xf32> -> vector<128x128xf32>
    %13 = vector.broadcast %3 : vector<128x1xf32> to vector<128x128xf32>
    %14 = arith.addf %12, %13 : vector<128x128xf32>
    %cst_15 = arith.constant 0.000000e+00 : f32
    %15 = vector.broadcast %cst_15 : f32 to vector<128x128xf32>
    %16 = arith.maximumf %14, %15 : vector<128x128xf32>
    %cst_16 = arith.constant dense<0.000000e+00> : vector<2x128xf32>
    %17 = tpu.matmul %4, %16, %cst_16 {dimension_numbers = #tpu.dot_dimension_numbers<[1], [0], [0], [1], [0, 0, 1, 1], [], []>} : vector<2x128xf32>, vector<128x128xf32>, vector<2x128xf32> -> vector<2x128xf32>
    %18 = vector.broadcast %5 : vector<2x1xf32> to vector<2x128xf32>
    %19 = arith.addf %17, %18 : vector<2x128xf32>
    %c0_17 = arith.constant 0 : index
    %c0_18 = arith.constant 0 : index
    %20 = vector.load %arg2[%c0_17, %c0_18] : memref<32x128xf32, #tpu.memory_space<vmem>>, vector<32x128xf32>
    %cst_19 = arith.constant dense<0.000000e+00> : vector<128x128xf32>
    %21 = tpu.matmul %0, %20, %cst_19 {dimension_numbers = #tpu.dot_dimension_numbers<[1], [0], [0], [1], [0, 0, 1, 1], [], []>} : vector<128x32xf32>, vector<32x128xf32>, vector<128x128xf32> -> vector<128x128xf32>
    %22 = vector.broadcast %1 : vector<128x1xf32> to vector<128x128xf32>
    %23 = arith.addf %21, %22 : vector<128x128xf32>
    %cst_20 = arith.constant 0.000000e+00 : f32
    %24 = vector.broadcast %cst_20 : f32 to vector<128x128xf32>
    %25 = arith.maximumf %23, %24 : vector<128x128xf32>
    %cst_21 = arith.constant dense<0.000000e+00> : vector<128x128xf32>
    %26 = tpu.matmul %2, %25, %cst_21 {dimension_numbers = #tpu.dot_dimension_numbers<[1], [0], [0], [1], [0, 0, 1, 1], [], []>} : vector<128x128xf32>, vector<128x128xf32>, vector<128x128xf32> -> vector<128x128xf32>
    %27 = vector.broadcast %3 : vector<128x1xf32> to vector<128x128xf32>
    %28 = arith.addf %26, %27 : vector<128x128xf32>
    %cst_22 = arith.constant 0.000000e+00 : f32
    %29 = vector.broadcast %cst_22 : f32 to vector<128x128xf32>
    %30 = arith.maximumf %28, %29 : vector<128x128xf32>
    %cst_23 = arith.constant dense<0.000000e+00> : vector<2x128xf32>
    %31 = tpu.matmul %4, %30, %cst_23 {dimension_numbers = #tpu.dot_dimension_numbers<[1], [0], [0], [1], [0, 0, 1, 1], [], []>} : vector<2x128xf32>, vector<128x128xf32>, vector<2x128xf32> -> vector<2x128xf32>
    %32 = vector.broadcast %5 : vector<2x1xf32> to vector<2x128xf32>
    %33 = arith.addf %31, %32 : vector<2x128xf32>
    %34 = vector.extract_strided_slice %19 {offsets = [0, 0], sizes = [1, 128], strides = [1, 1]} : vector<2x128xf32> to vector<1x128xf32>
    %35 = vector.extract_strided_slice %19 {offsets = [1, 0], sizes = [1, 128], strides = [1, 1]} : vector<2x128xf32> to vector<1x128xf32>
    %36 = vector.extract_strided_slice %33 {offsets = [1, 0], sizes = [1, 128], strides = [1, 1]} : vector<2x128xf32> to vector<1x128xf32>
    %c0_24 = arith.constant 0 : index
    %c0_25 = arith.constant 0 : index
    %37 = vector.load %arg3[%c0_24, %c0_25] : memref<1x128xf32, #tpu.memory_space<vmem>>, vector<1x128xf32>
    %cst_26 = arith.constant 1.000000e+00 : f32
    %38 = vector.broadcast %cst_26 : f32 to vector<1x128xf32>
    %39 = arith.subf %38, %37 : vector<1x128xf32>
    %cst_27 = arith.constant 9.900000e-01 : f32
    %40 = vector.broadcast %cst_27 : f32 to vector<1x128xf32>
    %41 = arith.mulf %40, %39 : vector<1x128xf32>
    %42 = arith.mulf %41, %36 : vector<1x128xf32>
    %43 = arith.addf %34, %42 : vector<1x128xf32>
    %44 = arith.subf %43, %35 : vector<1x128xf32>
    %c0_28 = arith.constant 0 : index
    %c0_29 = arith.constant 0 : index
    %45 = vector.load %arg4[%c0_28, %c0_29] : memref<1x128xf32, #tpu.memory_space<vmem>>, vector<1x128xf32>
    %46 = arith.subf %44, %45 : vector<1x128xf32>
    %c0_30 = arith.constant 0 : index
    %c0_31 = arith.constant 0 : index
    %47 = vector.load %arg11[%c0_30, %c0_31] : memref<1x128xf32, #tpu.memory_space<vmem>>, vector<1x128xf32>
    tpu.vector_store %arg11[%c0_30, %c0_31], %46 {strides = array<i32>} : memref<1x128xf32, #tpu.memory_space<vmem>>, vector<1x128xf32>,
    return
  }
  func.func @transform_0(%arg0: i32) -> (i32, i32) {
    %c0_i32 = arith.constant 0 : i32
    %c0_i32_0 = arith.constant 0 : i32
    return %c0_i32, %arg0 : i32, i32
  }
  func.func @transform_1(%arg0: i32) -> (i32, i32) {
    %c0_i32 = arith.constant 0 : i32
    %c0_i32_0 = arith.constant 0 : i32
    return %c0_i32, %arg0 : i32, i32
  }
  func.func @transform_2(%arg0: i32) -> (i32, i32) {
    %c0_i32 = arith.constant 0 : i32
    %c0_i32_0 = arith.constant 0 : i32
    return %c0_i32, %arg0 : i32, i32
  }
  func.func @transform_3(%arg0: i32) -> (i32, i32) {
    %c0_i32 = arith.constant 0 : i32
    %c0_i32_0 = arith.constant 0 : i32
    return %c0_i32, %arg0 : i32, i32
  }
  func.func @transform_4(%arg0: i32) -> (i32, i32) {
    %c0_i32 = arith.constant 0 : i32
    %c0_i32_0 = arith.constant 0 : i32
    %c0_i32_1 = arith.constant 0 : i32
    return %c0_i32, %c0_i32_0 : i32, i32
  }
  func.func @transform_5(%arg0: i32) -> (i32, i32) {
    %c0_i32 = arith.constant 0 : i32
    %c0_i32_0 = arith.constant 0 : i32
    %c0_i32_1 = arith.constant 0 : i32
    return %c0_i32, %c0_i32_0 : i32, i32
  }
  func.func @transform_6(%arg0: i32) -> (i32, i32) {
    %c0_i32 = arith.constant 0 : i32
    %c0_i32_0 = arith.constant 0 : i32
    %c0_i32_1 = arith.constant 0 : i32
    return %c0_i32, %c0_i32_0 : i32, i32
  }
  func.func @transform_7(%arg0: i32) -> (i32, i32) {
    %c0_i32 = arith.constant 0 : i32
    %c0_i32_0 = arith.constant 0 : i32
    %c0_i32_1 = arith.constant 0 : i32
    return %c0_i32, %c0_i32_0 : i32, i32
  }
  func.func @transform_8(%arg0: i32) -> (i32, i32) {
    %c0_i32 = arith.constant 0 : i32
    %c0_i32_0 = arith.constant 0 : i32
    %c0_i32_1 = arith.constant 0 : i32
    return %c0_i32, %c0_i32_0 : i32, i32
  }
  func.func @transform_9(%arg0: i32) -> (i32, i32) {
    %c0_i32 = arith.constant 0 : i32
    %c0_i32_0 = arith.constant 0 : i32
    %c0_i32_1 = arith.constant 0 : i32
    return %c0_i32, %c0_i32_0 : i32, i32
  }
  func.func @transform_10(%arg0: i32) -> (i32, i32) {
    %c0_i32 = arith.constant 0 : i32
    %c0_i32_0 = arith.constant 0 : i32
    return %c0_i32, %arg0 : i32, i32
  }
}

</mosaic_0001>

<llo_original>
// kernel: tpu_custom_call.1
$region0: #{tpu_custom_call.1}
  #allocation0 [shape = 'u32[]', space=smem, size = 0x4, offset = 0x4, fixed_abs, tag = 'smem constant byte address 0x4 - core index']
  #allocation1 [shape = 'u32[144,128]{1,0:T(1,128)}', space=vmem, size = 0x12000, scoped, tag = 'internal scratch']
  %s0 = inlined_call_operand.vmem [shape: f32[32,256], index: 0, kind: input, shape index: {}]
  %s1 = inlined_call_operand.vmem [shape: f32[32,256], index: 1, kind: input, shape index: {}]
  %s2 = inlined_call_operand.vmem [shape: f32[1,256], index: 2, kind: input, shape index: {}]
  %s3 = inlined_call_operand.vmem [shape: f32[1,256], index: 3, kind: input, shape index: {}]
  %s4 = inlined_call_operand.vmem [shape: f32[128,32], index: 4, kind: input, shape index: {}]
  %s5 = inlined_call_operand.vmem [shape: f32[128,1], index: 5, kind: input, shape index: {}]
  %s6 = inlined_call_operand.vmem [shape: f32[128,128], index: 6, kind: input, shape index: {}]
  %s7 = inlined_call_operand.vmem [shape: f32[128,1], index: 7, kind: input, shape index: {}]
  %s8 = inlined_call_operand.vmem [shape: f32[2,128], index: 8, kind: input, shape index: {}]
  %s9 = inlined_call_operand.vmem [shape: f32[2,1], index: 9, kind: input, shape index: {}]
  %s10 = inlined_call_operand.hbm [shape: f32[1,256], index: 10, kind: output, shape index: {}]
  %s11 = sld [smem:[#allocation0]]
  $region149: #{tpu_custom_call.1} parent=0
    _
  %s13 = ssub.s32 1, %s11
  %s14 = scalar_select 0, %s13, %s11
  $region1: #{tpu_custom_call.1} parent=0
    #allocation2 [shape = 'u8[32768]{0}', space=vmem, size = 0x8000, scoped, tag = 'input window, operand 0']
    #allocation3 [shape = 'u8[32768]{0}', space=vmem, size = 0x8000, scoped, tag = 'input window, operand 1']
    #allocation4 [shape = 'u8[1024]{0}', space=vmem, size = 0x400, scoped, tag = 'output window, operand 0']
    #allocation5 [shape = 's32[2]{0}', space=sflag, size = 0x8, scoped, tag = 'scoped memory for tpu_custom_call.1']
    %15 = vsyncpa [#allocation5], 0
    %s16 = scalar_lea.sflag [#allocation5], 1
    %17 = vsyncpa %s16, 0
    loop: start=0, step=1, limit=4
    $region2: #{tpu_custom_call.1} parent=1 // loop_pre_header
      _
    $region3: #{tpu_custom_call.1} parent=1 // loop_header
      %s19 = sphi 0, %s23
      %p20 = scmp.ge.s32.totalorder %s19, 4
      %s29 = sphi 0, %s31
      %s32 = sphi 0, %s29
      %s33 = sphi 0, %s32
      %s49 = sphi 0, %s33
      %s55 = sphi 0, %s57
      %s58 = sphi 0, %s55
      %s59 = sphi 0, %s58
      %s75 = sphi 0, %s59
      %s81 = sphi 0, %s83
      %s84 = sphi 0, %s81
      %s85 = sphi 0, %s84
      %s101 = sphi 0, %s85
      %s107 = sphi 0, %s109
      %s110 = sphi 0, %s107
      %s111 = sphi 0, %s110
      %s127 = sphi 0, %s111
      %s131 = sphi 0, %s131
      %s133 = sphi 0, %s131
      %s134 = sphi 0, %s133
      %s148 = sphi 0, %s134
      %s152 = sphi 0, %s152
      %s154 = sphi 0, %s152
      %s155 = sphi 0, %s154
      %s169 = sphi 0, %s155
      %s173 = sphi 0, %s173
      %s175 = sphi 0, %s173
      %s176 = sphi 0, %s175
      %s190 = sphi 0, %s176
      %s194 = sphi 0, %s194
      %s196 = sphi 0, %s194
      %s197 = sphi 0, %s196
      %s211 = sphi 0, %s197
      %s215 = sphi 0, %s215
      %s217 = sphi 0, %s215
      %s218 = sphi 0, %s217
      %s232 = sphi 0, %s218
      %s236 = sphi 0, %s236
      %s238 = sphi 0, %s236
      %s239 = sphi 0, %s238
      %s253 = sphi 0, %s239
      %s259 = sphi 0, %s261
      %s262 = sphi 0, %s259
      %s263 = sphi 0, %s262
      %s279 = sphi 0, %s263
    $region4: #{tpu_custom_call.1} parent=1 // loop_header_branch
      %22 = sbr.rel (%p20) target = $region8
    $region5: #{tpu_custom_call.1} parent=1 // loop_body
      %s24 = ssub.s32 %s19, 1
      %s25 = ssub.s32 %s19, 2
      %s26 = sadd.s32 %s19, 1
      %s27 = ssub.s32 %s19, %s26
      %p28 = scmp.eq.s32.totalorder %s27, 0
      %s30 = sadd.s32 %s29, 1
      %s31 = scalar_select %p28, %s29, %s30
      %p34 = pneg %p28
      %p35 = scmp.eq.s32.totalorder %s19, 1
      %p36 = por %p34, %p35
      %p37 = scmp.ne.s32.totalorder %s29, %s32
      %p38 = scmp.eq.s32.totalorder %s19, 0
      %p39 = por %p37, %p38
      %p40 = scmp.ne.s32.totalorder %s29, %s32
      %p41 = scmp.eq.s32.totalorder %s24, 1
      %p42 = por %p40, %p41
      %p43 = scmp.ne.s32.totalorder %s32, %s33
      %p44 = scmp.eq.s32.totalorder %s24, 0
      %p45 = por %p43, %p44
      %p46 = scmp.ne.s32.totalorder %s32, %s33
      %p47 = scmp.eq.s32.totalorder %s25, 1
      %p48 = por %p46, %p47
      %p50 = scmp.ne.s32.totalorder %s33, %s49
      %p51 = scmp.eq.s32.totalorder %s25, 0
      %p52 = por %p50, %p51
      %s53 = ssub.s32 %s19, %s26
      %p54 = scmp.eq.s32.totalorder %s53, 0
      %s56 = sadd.s32 %s55, 1
      %s57 = scalar_select %p54, %s55, %s56
      %p60 = pneg %p54
      %p61 = scmp.eq.s32.totalorder %s19, 1
      %p62 = por %p60, %p61
      %p63 = scmp.ne.s32.totalorder %s55, %s58
      %p64 = scmp.eq.s32.totalorder %s19, 0
      %p65 = por %p63, %p64
      %p66 = scmp.ne.s32.totalorder %s55, %s58
      %p67 = scmp.eq.s32.totalorder %s24, 1
      %p68 = por %p66, %p67
      %p69 = scmp.ne.s32.totalorder %s58, %s59
      %p70 = scmp.eq.s32.totalorder %s24, 0
      %p71 = por %p69, %p70
      %p72 = scmp.ne.s32.totalorder %s58, %s59
      %p73 = scmp.eq.s32.totalorder %s25, 1
      %p74 = por %p72, %p73
      %p76 = scmp.ne.s32.totalorder %s59, %s75
      %p77 = scmp.eq.s32.totalorder %s25, 0
      %p78 = por %p76, %p77
      %s79 = ssub.s32 %s19, %s26
      %p80 = scmp.eq.s32.totalorder %s79, 0
      %s82 = sadd.s32 %s81, 1
      %s83 = scalar_select %p80, %s81, %s82
      %p86 = pneg %p80
      %p87 = scmp.eq.s32.totalorder %s19, 1
      %p88 = por %p86, %p87
      %p89 = scmp.ne.s32.totalorder %s81, %s84
      %p90 = scmp.eq.s32.totalorder %s19, 0
      %p91 = por %p89, %p90
      %p92 = scmp.ne.s32.totalorder %s81, %s84
      %p93 = scmp.eq.s32.totalorder %s24, 1
      %p94 = por %p92, %p93
      %p95 = scmp.ne.s32.totalorder %s84, %s85
      %p96 = scmp.eq.s32.totalorder %s24, 0
      %p97 = por %p95, %p96
      %p98 = scmp.ne.s32.totalorder %s84, %s85
      %p99 = scmp.eq.s32.totalorder %s25, 1
      %p100 = por %p98, %p99
      %p102 = scmp.ne.s32.totalorder %s85, %s101
      %p103 = scmp.eq.s32.totalorder %s25, 0
      %p104 = por %p102, %p103
      %s105 = ssub.s32 %s19, %s26
      %p106 = scmp.eq.s32.totalorder %s105, 0
      %s108 = sadd.s32 %s107, 1
      %s109 = scalar_select %p106, %s107, %s108
      %p112 = pneg %p106
      %p113 = scmp.eq.s32.totalorder %s19, 1
      %p114 = por %p112, %p113
      %p115 = scmp.ne.s32.totalorder %s107, %s110
      %p116 = scmp.eq.s32.totalorder %s19, 0
      %p117 = por %p115, %p116
      %p118 = scmp.ne.s32.totalorder %s107, %s110
      %p119 = scmp.eq.s32.totalorder %s24, 1
      %p120 = por %p118, %p119
      %p121 = scmp.ne.s32.totalorder %s110, %s111
      %p122 = scmp.eq.s32.totalorder %s24, 0
      %p123 = por %p121, %p122
      %p124 = scmp.ne.s32.totalorder %s110, %s111
      %p125 = scmp.eq.s32.totalorder %s25, 1
      %p126 = por %p124, %p125
      %p128 = scmp.ne.s32.totalorder %s111, %s127
      %p129 = scmp.eq.s32.totalorder %s25, 0
      %p130 = por %p128, %p129
      %s132 = sadd.s32 %s131, 1
      %p135 = scmp.eq.s32.totalorder %s19, 1
      %p136 = scmp.ne.s32.totalorder %s131, %s133
      %p137 = scmp.eq.s32.totalorder %s19, 0
      %p138 = por %p136, %p137
      %p139 = scmp.ne.s32.totalorder %s131, %s133
      %p140 = scmp.eq.s32.totalorder %s24, 1
      %p141 = por %p139, %p140
      %p142 = scmp.ne.s32.totalorder %s133, %s134
      %p143 = scmp.eq.s32.totalorder %s24, 0
      %p144 = por %p142, %p143
      %p145 = scmp.ne.s32.totalorder %s133, %s134
      %p146 = scmp.eq.s32.totalorder %s25, 1
      %p147 = por %p145, %p146
      %p149 = scmp.ne.s32.totalorder %s134, %s148
      %p150 = scmp.eq.s32.totalorder %s25, 0
      %p151 = por %p149, %p150
      %s153 = sadd.s32 %s152, 1
      %p156 = scmp.eq.s32.totalorder %s19, 1
      %p157 = scmp.ne.s32.totalorder %s152, %s154
      %p158 = scmp.eq.s32.totalorder %s19, 0
      %p159 = por %p157, %p158
      %p160 = scmp.ne.s32.totalorder %s152, %s154
      %p161 = scmp.eq.s32.totalorder %s24, 1
      %p162 = por %p160, %p161
      %p163 = scmp.ne.s32.totalorder %s154, %s155
      %p164 = scmp.eq.s32.totalorder %s24, 0
      %p165 = por %p163, %p164
      %p166 = scmp.ne.s32.totalorder %s154, %s155
      %p167 = scmp.eq.s32.totalorder %s25, 1
      %p168 = por %p166, %p167
      %p170 = scmp.ne.s32.totalorder %s155, %s169
      %p171 = scmp.eq.s32.totalorder %s25, 0
      %p172 = por %p170, %p171
      %s174 = sadd.s32 %s173, 1
      %p177 = scmp.eq.s32.totalorder %s19, 1
      %p178 = scmp.ne.s32.totalorder %s173, %s175
      %p179 = scmp.eq.s32.totalorder %s19, 0
      %p180 = por %p178, %p179
      %p181 = scmp.ne.s32.totalorder %s173, %s175
      %p182 = scmp.eq.s32.totalorder %s24, 1
      %p183 = por %p181, %p182
      %p184 = scmp.ne.s32.totalorder %s175, %s176
      %p185 = scmp.eq.s32.totalorder %s24, 0
      %p186 = por %p184, %p185
      %p187 = scmp.ne.s32.totalorder %s175, %s176
      %p188 = scmp.eq.s32.totalorder %s25, 1
      %p189 = por %p187, %p188
      %p191 = scmp.ne.s32.totalorder %s176, %s190
      %p192 = scmp.eq.s32.totalorder %s25, 0
      %p193 = por %p191, %p192
      %s195 = sadd.s32 %s194, 1
      %p198 = scmp.eq.s32.totalorder %s19, 1
      %p199 = scmp.ne.s32.totalorder %s194, %s196
      %p200 = scmp.eq.s32.totalorder %s19, 0
      %p201 = por %p199, %p200
      %p202 = scmp.ne.s32.totalorder %s194, %s196
      %p203 = scmp.eq.s32.totalorder %s24, 1
      %p204 = por %p202, %p203
      %p205 = scmp.ne.s32.totalorder %s196, %s197
      %p206 = scmp.eq.s32.totalorder %s24, 0
      %p207 = por %p205, %p206
      %p208 = scmp.ne.s32.totalorder %s196, %s197
      %p209 = scmp.eq.s32.totalorder %s25, 1
      %p210 = por %p208, %p209
      %p212 = scmp.ne.s32.totalorder %s197, %s211
      %p213 = scmp.eq.s32.totalorder %s25, 0
      %p214 = por %p212, %p213
      %s216 = sadd.s32 %s215, 1
      %p219 = scmp.eq.s32.totalorder %s19, 1
      %p220 = scmp.ne.s32.totalorder %s215, %s217
      %p221 = scmp.eq.s32.totalorder %s19, 0
      %p222 = por %p220, %p221
      %p223 = scmp.ne.s32.totalorder %s215, %s217
      %p224 = scmp.eq.s32.totalorder %s24, 1
      %p225 = por %p223, %p224
      %p226 = scmp.ne.s32.totalorder %s217, %s218
      %p227 = scmp.eq.s32.totalorder %s24, 0
      %p228 = por %p226, %p227
      %p229 = scmp.ne.s32.totalorder %s217, %s218
      %p230 = scmp.eq.s32.totalorder %s25, 1
      %p231 = por %p229, %p230
      %p233 = scmp.ne.s32.totalorder %s218, %s232
      %p234 = scmp.eq.s32.totalorder %s25, 0
      %p235 = por %p233, %p234
      %s237 = sadd.s32 %s236, 1
      %p240 = scmp.eq.s32.totalorder %s19, 1
      %p241 = scmp.ne.s32.totalorder %s236, %s238
      %p242 = scmp.eq.s32.totalorder %s19, 0
      %p243 = por %p241, %p242
      %p244 = scmp.ne.s32.totalorder %s236, %s238
      %p245 = scmp.eq.s32.totalorder %s24, 1
      %p246 = por %p244, %p245
      %p247 = scmp.ne.s32.totalorder %s238, %s239
      %p248 = scmp.eq.s32.totalorder %s24, 0
      %p249 = por %p247, %p248
      %p250 = scmp.ne.s32.totalorder %s238, %s239
      %p251 = scmp.eq.s32.totalorder %s25, 1
      %p252 = por %p250, %p251
      %p254 = scmp.ne.s32.totalorder %s239, %s253
      %p255 = scmp.eq.s32.totalorder %s25, 0
      %p256 = por %p254, %p255
      %s257 = ssub.s32 %s19, %s26
      %p258 = scmp.eq.s32.totalorder %s257, 0
      %s260 = sadd.s32 %s259, 1
      %s261 = scalar_select %p258, %s259, %s260
      %p264 = pneg %p258
      %p265 = scmp.eq.s32.totalorder %s19, 1
      %p266 = por %p264, %p265
      %p267 = scmp.ne.s32.totalorder %s259, %s262
      %p268 = scmp.eq.s32.totalorder %s19, 0
      %p269 = por %p267, %p268
      %p270 = scmp.ne.s32.totalorder %s259, %s262
      %p271 = scmp.eq.s32.totalorder %s24, 1
      %p272 = por %p270, %p271
      %p273 = scmp.ne.s32.totalorder %s262, %s263
      %p274 = scmp.eq.s32.totalorder %s24, 0
      %p275 = por %p273, %p274
      %p276 = scmp.ne.s32.totalorder %s262, %s263
      %p277 = scmp.eq.s32.totalorder %s25, 1
      %p278 = por %p276, %p277
      %p280 = scmp.ne.s32.totalorder %s263, %s279
      %p281 = scmp.eq.s32.totalorder %s25, 0
      %p282 = por %p280, %p281
      %p283 = scmp.le.s32.totalorder 1, %s19
      %p284 = scmp.lt.s32.totalorder %s19, 3
      %p285 = pnand %p283, %p284
      %p286 = pneg %p285
      // Predicated region
      $region9: #{tpu_custom_call.1} parent=5 // pred_check
        _
      $region10: #{tpu_custom_call.1} parent=5 // pred_check_branch
        %288 = sbr.rel (%p285) target = $region12
      $region11: #{tpu_custom_call.1} parent=5 // pred_region
        %s289 = ssub.s32 %s19, 1
        // Predicated region
        $region13: #{tpu_custom_call.1} parent=11 // pred_check
          %p290 = pneg %p144
        $region14: #{tpu_custom_call.1} parent=11 // pred_check_branch
          %292 = sbr.rel (%p290) target = $region16
        $region15: #{tpu_custom_call.1} parent=11 // pred_region
          _
        $region16: #{tpu_custom_call.1} parent=11 // pred_fallthru
          _
        // Predicated region
        $region17: #{tpu_custom_call.1} parent=11 // pred_check
          %p293 = pneg %p165
        $region18: #{tpu_custom_call.1} parent=11 // pred_check_branch
          %295 = sbr.rel (%p293) target = $region20
        $region19: #{tpu_custom_call.1} parent=11 // pred_region
          _
        $region20: #{tpu_custom_call.1} parent=11 // pred_fallthru
          _
        // Predicated region
        $region21: #{tpu_custom_call.1} parent=11 // pred_check
          %p296 = pneg %p186
        $region22: #{tpu_custom_call.1} parent=11 // pred_check_branch
          %298 = sbr.rel (%p296) target = $region24
        $region23: #{tpu_custom_call.1} parent=11 // pred_region
          _
        $region24: #{tpu_custom_call.1} parent=11 // pred_fallthru
          _
        // Predicated region
        $region25: #{tpu_custom_call.1} parent=11 // pred_check
          %p299 = pneg %p207
        $region26: #{tpu_custom_call.1} parent=11 // pred_check_branch
          %301 = sbr.rel (%p299) target = $region28
        $region27: #{tpu_custom_call.1} parent=11 // pred_region
          _
        $region28: #{tpu_custom_call.1} parent=11 // pred_fallthru
          _
        // Predicated region
        $region29: #{tpu_custom_call.1} parent=11 // pred_check
          %p302 = pneg %p228
        $region30: #{tpu_custom_call.1} parent=11 // pred_check_branch
          %304 = sbr.rel (%p302) target = $region32
        $region31: #{tpu_custom_call.1} parent=11 // pred_region
          _
        $region32: #{tpu_custom_call.1} parent=11 // pred_fallthru
          _
        // Predicated region
        $region33: #{tpu_custom_call.1} parent=11 // pred_check
          %p305 = pneg %p249
        $region34: #{tpu_custom_call.1} parent=11 // pred_check_branch
          %307 = sbr.rel (%p305) target = $region36
        $region35: #{tpu_custom_call.1} parent=11 // pred_region
          _
        $region36: #{tpu_custom_call.1} parent=11 // pred_fallthru
          _
      $region12: #{tpu_custom_call.1} parent=5 // pred_fallthru
        _
      %p308 = scmp.lt.s32.totalorder %s19, 2
      // Predicated region
      $region37: #{tpu_custom_call.1} parent=5 // pred_check
        %p309 = pneg %p308
      $region38: #{tpu_custom_call.1} parent=5 // pred_check_branch
        %311 = sbr.rel (%p309) target = $region40
      $region39: #{tpu_custom_call.1} parent=5 // pred_region
        // Predicated region
        $region41: #{tpu_custom_call.1} parent=39 // pred_check
          %p312 = pneg %p39
        $region42: #{tpu_custom_call.1} parent=39 // pred_check_branch
          %314 = sbr.rel (%p312) target = $region44
        $region43: #{tpu_custom_call.1} parent=39 // pred_region
          %s315 = sand.u32 %s29, 1
          %s316 = sand.u32 %s29, 1
          %s317 = smul.addr %s316, 32
          %s318 = scalar_lea.vmem [#allocation2], %s317
          %s319 = smul.addr %s19, 8
          %s320 = scalar_lea.vmem %s0, %s319
          // Predicated region
          $region45: #{tpu_custom_call.1} parent=43 // pred_check
            _
          $region46: #{tpu_custom_call.1} parent=43 // pred_check_branch
            %322 = sbr.rel (0) target = $region48
          $region47: #{tpu_custom_call.1} parent=43 // pred_region
            // Predicated region
            $region49: #{tpu_custom_call.1} parent=47 // pred_check
              _
            $region50: #{tpu_custom_call.1} parent=47 // pred_check_branch
              %324 = sbr.rel (0) target = $region52
            $region51: #{tpu_custom_call.1} parent=47 // pred_region
              // Predicated region
              $region64: #{tpu_custom_call.1} parent=51 // pred_check
                _
              $region65: #{tpu_custom_call.1} parent=51 // pred_check_branch
                %346 = sbr.rel (0) target = $region67
              $region66: #{tpu_custom_call.1} parent=51 // pred_region
                loop: start=0, step=1, limit=1
                $region68: #{tpu_custom_call.1} parent=66 // loop_pre_header
                  _
                $region69: #{tpu_custom_call.1} parent=66 // loop_header
                  %s348 = sphi 0, %s352
                  %p349 = scmp.ge.s32.totalorder %s348, 1
                  %s353 = sphi %s320, %s320
                  %s354 = sphi %s318, %s318
                $region70: #{tpu_custom_call.1} parent=66 // loop_header_branch
                  %351 = sbr.rel (%p349) target = $region74
                $region71: #{tpu_custom_call.1} parent=66 // loop_body
                  %v355 = vld [vmem:[%s353] sm:$0xff]
                  %356 = vst [vmem:[%s354] sm:$0xff] %v355
                  %v357 = vld [vmem:[%s353 + $0x10] sm:$0xff]
                  %358 = vst [vmem:[%s354 + $0x8] sm:$0xff] %v357
                  %v359 = vld [vmem:[%s353 + $0x20] sm:$0xff]
                  %360 = vst [vmem:[%s354 + $0x10] sm:$0xff] %v359
                  %v361 = vld [vmem:[%s353 + $0x30] sm:$0xff]
                  %362 = vst [vmem:[%s354 + $0x18] sm:$0xff] %v361
                $region72: #{tpu_custom_call.1} parent=66 // loop_footer
                  %s352 = sadd.s32 1, %s348
                $region73: #{tpu_custom_call.1} parent=66 // loop_footer_branch
                  %347 = sbr.rel target = $region69
                $region74: #{tpu_custom_call.1} parent=66 // loop_exit
                  _
              $region67: #{tpu_custom_call.1} parent=51 // pred_fallthru
                _
              // Predicated region
              $region75: #{tpu_custom_call.1} parent=51 // pred_check
                _
              $region76: #{tpu_custom_call.1} parent=51 // pred_check_branch
                %364 = sbr.rel target = $region78
              $region77: #{tpu_custom_call.1} parent=51 // pred_region
                _
              $region78: #{tpu_custom_call.1} parent=51 // pred_fallthru
                _
            $region52: #{tpu_custom_call.1} parent=47 // pred_fallthru
              _
            // Predicated region
            $region53: #{tpu_custom_call.1} parent=47 // pred_check
              _
            $region54: #{tpu_custom_call.1} parent=47 // pred_check_branch
              %326 = sbr.rel target = $region56
            $region55: #{tpu_custom_call.1} parent=47 // pred_region
              %s328 = ssub.s32 256, 1
              loop: start=0, step=1, limit=1
              $region57: #{tpu_custom_call.1} parent=55 // loop_pre_header
                _
              $region58: #{tpu_custom_call.1} parent=55 // loop_header
                %s330 = sphi 0, %s334
                %p331 = scmp.ge.s32.totalorder %s330, 1
                %s335 = sphi %s320, %s320
                %s336 = sphi %s318, %s318
              $region59: #{tpu_custom_call.1} parent=55 // loop_header_branch
                %333 = sbr.rel (%p331) target = $region63
              $region60: #{tpu_custom_call.1} parent=55 // loop_body
                %v337 = vld [vmem:[%s335] sm:%s328]
                %338 = vst [vmem:[%s336] sm:%s328] %v337
                %v339 = vld [vmem:[%s335 + $0x10] sm:%s328]
                %340 = vst [vmem:[%s336 + $0x8] sm:%s328] %v339
                %v341 = vld [vmem:[%s335 + $0x20] sm:%s328]
                %342 = vst [vmem:[%s336 + $0x10] sm:%s328] %v341
                %v343 = vld [vmem:[%s335 + $0x30] sm:%s328]
                %344 = vst [vmem:[%s336 + $0x18] sm:%s328] %v343
              $region61: #{tpu_custom_call.1} parent=55 // loop_footer
                %s334 = sadd.s32 1, %s330
              $region62: #{tpu_custom_call.1} parent=55 // loop_footer_branch
                %329 = sbr.rel target = $region58
              $region63: #{tpu_custom_call.1} parent=55 // loop_exit
                _
            $region56: #{tpu_custom_call.1} parent=47 // pred_fallthru
              _
          $region48: #{tpu_custom_call.1} parent=43 // pred_fallthru
            _
          %365 = vnop
        $region44: #{tpu_custom_call.1} parent=39 // pred_fallthru
          _
        // Predicated region
        $region79: #{tpu_custom_call.1} parent=39 // pred_check
          %p366 = pneg %p65
        $region80: #{tpu_custom_call.1} parent=39 // pred_check_branch
          %368 = sbr.rel (%p366) target = $region82
        $region81: #{tpu_custom_call.1} parent=39 // pred_region
          %s369 = sand.u32 %s55, 1
          %s370 = sand.u32 %s55, 1
          %s371 = smul.addr %s370, 32
          %s372 = scalar_lea.vmem [#allocation3], %s371
          %s373 = smul.addr %s19, 8
          %s374 = scalar_lea.vmem %s1, %s373
          // Predicated region
          $region83: #{tpu_custom_call.1} parent=81 // pred_check
            _
          $region84: #{tpu_custom_call.1} parent=81 // pred_check_branch
            %376 = sbr.rel (0) target = $region86
          $region85: #{tpu_custom_call.1} parent=81 // pred_region
            // Predicated region
            $region87: #{tpu_custom_call.1} parent=85 // pred_check
              _
            $region88: #{tpu_custom_call.1} parent=85 // pred_check_branch
              %378 = sbr.rel (0) target = $region90
            $region89: #{tpu_custom_call.1} parent=85 // pred_region
              // Predicated region
              $region102: #{tpu_custom_call.1} parent=89 // pred_check
                _
              $region103: #{tpu_custom_call.1} parent=89 // pred_check_branch
                %400 = sbr.rel (0) target = $region105
              $region104: #{tpu_custom_call.1} parent=89 // pred_region
                loop: start=0, step=1, limit=1
                $region106: #{tpu_custom_call.1} parent=104 // loop_pre_header
                  _
                $region107: #{tpu_custom_call.1} parent=104 // loop_header
                  %s402 = sphi 0, %s406
                  %p403 = scmp.ge.s32.totalorder %s402, 1
                  %s407 = sphi %s374, %s374
                  %s408 = sphi %s372, %s372
                $region108: #{tpu_custom_call.1} parent=104 // loop_header_branch
                  %405 = sbr.rel (%p403) target = $region112
                $region109: #{tpu_custom_call.1} parent=104 // loop_body
                  %v409 = vld [vmem:[%s407] sm:$0xff]
                  %410 = vst [vmem:[%s408] sm:$0xff] %v409
                  %v411 = vld [vmem:[%s407 + $0x10] sm:$0xff]
                  %412 = vst [vmem:[%s408 + $0x8] sm:$0xff] %v411
                  %v413 = vld [vmem:[%s407 + $0x20] sm:$0xff]
                  %414 = vst [vmem:[%s408 + $0x10] sm:$0xff] %v413
                  %v415 = vld [vmem:[%s407 + $0x30] sm:$0xff]
                  %416 = vst [vmem:[%s408 + $0x18] sm:$0xff] %v415
                $region110: #{tpu_custom_call.1} parent=104 // loop_footer
                  %s406 = sadd.s32 1, %s402
                $region111: #{tpu_custom_call.1} parent=104 // loop_footer_branch
                  %401 = sbr.rel target = $region107
                $region112: #{tpu_custom_call.1} parent=104 // loop_exit
                  _
              $region105: #{tpu_custom_call.1} parent=89 // pred_fallthru
                _
              // Predicated region
              $region113: #{tpu_custom_call.1} parent=89 // pred_check
                _
              $region114: #{tpu_custom_call.1} parent=89 // pred_check_branch
                %418 = sbr.rel target = $region116
              $region115: #{tpu_custom_call.1} parent=89 // pred_region
                _
              $region116: #{tpu_custom_call.1} parent=89 // pred_fallthru
                _
            $region90: #{tpu_custom_call.1} parent=85 // pred_fallthru
              _
            // Predicated region
            $region91: #{tpu_custom_call.1} parent=85 // pred_check
              _
            $region92: #{tpu_custom_call.1} parent=85 // pred_check_branch
              %380 = sbr.rel target = $region94
            $region93: #{tpu_custom_call.1} parent=85 // pred_region
              %s382 = ssub.s32 256, 1
              loop: start=0, step=1, limit=1
              $region95: #{tpu_custom_call.1} parent=93 // loop_pre_header
                _
              $region96: #{tpu_custom_call.1} parent=93 // loop_header
                %s384 = sphi 0, %s388
                %p385 = scmp.ge.s32.totalorder %s384, 1
                %s389 = sphi %s374, %s374
                %s390 = sphi %s372, %s372
              $region97: #{tpu_custom_call.1} parent=93 // loop_header_branch
                %387 = sbr.rel (%p385) target = $region101
              $region98: #{tpu_custom_call.1} parent=93 // loop_body
                %v391 = vld [vmem:[%s389] sm:%s382]
                %392 = vst [vmem:[%s390] sm:%s382] %v391
                %v393 = vld [vmem:[%s389 + $0x10] sm:%s382]
                %394 = vst [vmem:[%s390 + $0x8] sm:%s382] %v393
                %v395 = vld [vmem:[%s389 + $0x20] sm:%s382]
                %396 = vst [vmem:[%s390 + $0x10] sm:%s382] %v395
                %v397 = vld [vmem:[%s389 + $0x30] sm:%s382]
                %398 = vst [vmem:[%s390 + $0x18] sm:%s382] %v397
              $region99: #{tpu_custom_call.1} parent=93 // loop_footer
                %s388 = sadd.s32 1, %s384
              $region100: #{tpu_custom_call.1} parent=93 // loop_footer_branch
                %383 = sbr.rel target = $region96
              $region101: #{tpu_custom_call.1} parent=93 // loop_exit
                _
            $region94: #{tpu_custom_call.1} parent=85 // pred_fallthru
              _
          $region86: #{tpu_custom_call.1} parent=81 // pred_fallthru
            _
          %419 = vnop
        $region82: #{tpu_custom_call.1} parent=39 // pred_fallthru
          _
        // Predicated region
        $region117: #{tpu_custom_call.1} parent=39 // pred_check
          %p420 = pneg %p91
        $region118: #{tpu_custom_call.1} parent=39 // pred_check_branch
          %422 = sbr.rel (%p420) target = $region120
        $region119: #{tpu_custom_call.1} parent=39 // pred_region
          %p423 = scmp.lt.s32.totalorder %s19, 1
          %s424 = scalar_select %p423, %s19, 1
          %s425 = scalar_lea.vmem %s2, %s424
        $region120: #{tpu_custom_call.1} parent=39 // pred_fallthru
          _
        // Predicated region
        $region121: #{tpu_custom_call.1} parent=39 // pred_check
          %p426 = pneg %p117
        $region122: #{tpu_custom_call.1} parent=39 // pred_check_branch
          %428 = sbr.rel (%p426) target = $region124
        $region123: #{tpu_custom_call.1} parent=39 // pred_region
          %p429 = scmp.lt.s32.totalorder %s19, 1
          %s430 = scalar_select %p429, %s19, 1
          %s431 = scalar_lea.vmem %s3, %s430
        $region124: #{tpu_custom_call.1} parent=39 // pred_fallthru
          _
      $region40: #{tpu_custom_call.1} parent=5 // pred_fallthru
        _
      %p432 = scmp.le.s32.totalorder 1, %s19
      %p433 = scmp.lt.s32.totalorder %s19, 3
      %p434 = pnand %p432, %p433
      %p435 = pneg %p434
      // Predicated region
      $region125: #{tpu_custom_call.1} parent=5 // pred_check
        _
      $region126: #{tpu_custom_call.1} parent=5 // pred_check_branch
        %437 = sbr.rel (%p434) target = $region128
      $region127: #{tpu_custom_call.1} parent=5 // pred_region
        %s438 = ssub.s32 %s19, 1
        %s439 = sand.u32 %s32, 1
        %s440 = sand.u32 %s32, 1
        %s441 = smul.addr %s440, 32
        %s442 = scalar_lea.vmem [#allocation2], %s441
        // Predicated region
        $region129: #{tpu_custom_call.1} parent=127 // pred_check
          %p443 = pneg %p45
        $region130: #{tpu_custom_call.1} parent=127 // pred_check_branch
          %445 = sbr.rel (%p443) target = $region132
        $region131: #{tpu_custom_call.1} parent=127 // pred_region
          _
        $region132: #{tpu_custom_call.1} parent=127 // pred_fallthru
          _
        %s446 = sand.u32 %s58, 1
        %s447 = sand.u32 %s58, 1
        %s448 = smul.addr %s447, 32
        %s449 = scalar_lea.vmem [#allocation3], %s448
        // Predicated region
        $region133: #{tpu_custom_call.1} parent=127 // pred_check
          %p450 = pneg %p71
        $region134: #{tpu_custom_call.1} parent=127 // pred_check_branch
          %452 = sbr.rel (%p450) target = $region136
        $region135: #{tpu_custom_call.1} parent=127 // pred_region
          _
        $region136: #{tpu_custom_call.1} parent=127 // pred_fallthru
          _
        %s453 = sand.u32 %s32, 1
        %s454 = sand.u32 %s32, 1
        %s455 = smul.addr %s454, 32
        %s456 = scalar_lea.vmem [#allocation2], %s455
        %p457 = pneg %p45
        %p458 = pneg %p42
        %s459 = sand.u32 %s58, 1
        %s460 = sand.u32 %s58, 1
        %s461 = smul.addr %s460, 32
        %s462 = scalar_lea.vmem [#allocation3], %s461
        %p463 = pneg %p71
        %p464 = pneg %p68
        %p465 = scmp.lt.s32.totalorder %s24, 1
        %s466 = scalar_select %p465, %s24, 1
        %s467 = scalar_lea.vmem %s2, %s466
        %p468 = pneg %p97
        %p469 = pneg %p94
        %p470 = scmp.lt.s32.totalorder %s24, 1
        %s471 = scalar_select %p470, %s24, 1
        %s472 = scalar_lea.vmem %s3, %s471
        %p473 = pneg %p123
        %p474 = pneg %p120
        %p475 = pneg %p144
        %p476 = pneg %p141
        %p477 = pneg %p165
        %p478 = pneg %p162
        %p479 = pneg %p186
        %p480 = pneg %p183
        %p481 = pneg %p207
        %p482 = pneg %p204
        %p483 = pneg %p228
        %p484 = pneg %p225
        %p485 = pneg %p249
        %p486 = pneg %p246
        %p487 = pneg %p275
        %p488 = pneg %p272
        %s489 = sand.u32 %s262, 1
        %s490 = scalar_lea.sflag [#allocation5], %s489
        %s491 = sand.u32 %s262, 1
        %s492 = scalar_lea.vmem [#allocation4], %s491
        %p493 = scmp.lt.s32.totalorder %s24, 1
        %s494 = scalar_select %p493, %s24, 1
        %s495 = scalar_lea.vmem %s2, %s494
        %p496 = scmp.lt.s32.totalorder %s24, 1
        %s497 = scalar_select %p496, %s24, 1
        %s498 = scalar_lea.vmem %s3, %s497
        %v499 = vld [vmem:[%s4] sm:$0xff]
        %v500 = vld [vmem:[%s4 + $0x8] sm:$0xff]
        %v501 = vld [vmem:[%s4 + $0x10] sm:$0xff]
        %v502 = vld [vmem:[%s4 + $0x18] sm:$0xff]
        %v503 = vld [vmem:[%s4 + $0x20] sm:$0xff]
        %v504 = vld [vmem:[%s4 + $0x28] sm:$0xff]
        %v505 = vld [vmem:[%s4 + $0x30] sm:$0xff]
        %v506 = vld [vmem:[%s4 + $0x38] sm:$0xff]
        %v507 = vld [vmem:[%s4 + $0x40] sm:$0xff]
        %v508 = vld [vmem:[%s4 + $0x48] sm:$0xff]
        %v509 = vld [vmem:[%s4 + $0x50] sm:$0xff]
        %v510 = vld [vmem:[%s4 + $0x58] sm:$0xff]
        %v511 = vld [vmem:[%s4 + $0x60] sm:$0xff]
        %v512 = vld [vmem:[%s4 + $0x68] sm:$0xff]
        %v513 = vld [vmem:[%s4 + $0x70] sm:$0xff]
        %v514 = vld [vmem:[%s4 + $0x78] sm:$0xff]
        %v515 = vld [vmem:[%s5] sm:$0xff]
        %v516 = vld [vmem:[%s5 + $0x8] sm:$0xff]
        %v517 = vld [vmem:[%s5 + $0x10] sm:$0xff]
        %v518 = vld [vmem:[%s5 + $0x18] sm:$0xff]
        %v519 = vld [vmem:[%s5 + $0x20] sm:$0xff]
        %v520 = vld [vmem:[%s5 + $0x28] sm:$0xff]
        %v521 = vld [vmem:[%s5 + $0x30] sm:$0xff]
        %v522 = vld [vmem:[%s5 + $0x38] sm:$0xff]
        %v523 = vld [vmem:[%s5 + $0x40] sm:$0xff]
        %v524 = vld [vmem:[%s5 + $0x48] sm:$0xff]
        %v525 = vld [vmem:[%s5 + $0x50] sm:$0xff]
        %v526 = vld [vmem:[%s5 + $0x58] sm:$0xff]
        %v527 = vld [vmem:[%s5 + $0x60] sm:$0xff]
        %v528 = vld [vmem:[%s5 + $0x68] sm:$0xff]
        %v529 = vld [vmem:[%s5 + $0x70] sm:$0xff]
        %v530 = vld [vmem:[%s5 + $0x78] sm:$0xff]
        %v531 = vld [vmem:[%s6] sm:$0xff]
        %v532 = vld [vmem:[%s6 + $0x8] sm:$0xff]
        %v533 = vld [vmem:[%s6 + $0x10] sm:$0xff]
        %v534 = vld [vmem:[%s6 + $0x18] sm:$0xff]
        %v535 = vld [vmem:[%s6 + $0x20] sm:$0xff]
        %v536 = vld [vmem:[%s6 + $0x28] sm:$0xff]
        %v537 = vld [vmem:[%s6 + $0x30] sm:$0xff]
        %v538 = vld [vmem:[%s6 + $0x38] sm:$0xff]
        %v539 = vld [vmem:[%s6 + $0x40] sm:$0xff]
        %v540 = vld [vmem:[%s6 + $0x48] sm:$0xff]
        %v541 = vld [vmem:[%s6 + $0x50] sm:$0xff]
        %v542 = vld [vmem:[%s6 + $0x58] sm:$0xff]
        %v543 = vld [vmem:[%s6 + $0x60] sm:$0xff]
        %v544 = vld [vmem:[%s6 + $0x68] sm:$0xff]
        %v545 = vld [vmem:[%s6 + $0x70] sm:$0xff]
        %v546 = vld [vmem:[%s6 + $0x78] sm:$0xff]
        %v547 = vld [vmem:[%s7] sm:$0xff]
        %v548 = vld [vmem:[%s7 + $0x8] sm:$0xff]
        %v549 = vld [vmem:[%s7 + $0x10] sm:$0xff]
        %v550 = vld [vmem:[%s7 + $0x18] sm:$0xff]
        %v551 = vld [vmem:[%s7 + $0x20] sm:$0xff]
        %v552 = vld [vmem:[%s7 + $0x28] sm:$0xff]
        %v553 = vld [vmem:[%s7 + $0x30] sm:$0xff]
        %v554 = vld [vmem:[%s7 + $0x38] sm:$0xff]
        %v555 = vld [vmem:[%s7 + $0x40] sm:$0xff]
        %v556 = vld [vmem:[%s7 + $0x48] sm:$0xff]
        %v557 = vld [vmem:[%s7 + $0x50] sm:$0xff]
        %v558 = vld [vmem:[%s7 + $0x58] sm:$0xff]
        %v559 = vld [vmem:[%s7 + $0x60] sm:$0xff]
        %v560 = vld [vmem:[%s7 + $0x68] sm:$0xff]
        %v561 = vld [vmem:[%s7 + $0x70] sm:$0xff]
        %v562 = vld [vmem:[%s7 + $0x78] sm:$0xff]
        %v563 = vld [vmem:[%s8] sm:$0x3]
        %v564 = vld [vmem:[%s9] sm:$0x3]
        %v565 = vld [vmem:[%s442] sm:$0xff]
        %v566 = vld [vmem:[%s442 + $0x8] sm:$0xff]
        %v567 = vld [vmem:[%s442 + $0x10] sm:$0xff]
        %v568 = vld [vmem:[%s442 + $0x18] sm:$0xff]
        %570 = vset.pattern.permute.xlu0 0
        %571 = vperm.xlu0 %570, %v515
        %v572 = vpop.permute.xlu0 %571
        %575 = vset.pattern.permute.xlu0 0
        %576 = vperm.xlu0 %575, %v516
        %v577 = vpop.permute.xlu0 %576
        %580 = vset.pattern.permute.xlu0 0
        %581 = vperm.xlu0 %580, %v517
        %v582 = vpop.permute.xlu0 %581
        %585 = vset.pattern.permute.xlu0 0
        %586 = vperm.xlu0 %585, %v518
        %v587 = vpop.permute.xlu0 %586
        %590 = vset.pattern.permute.xlu0 0
        %591 = vperm.xlu0 %590, %v519
        %v592 = vpop.permute.xlu0 %591
        %595 = vset.pattern.permute.xlu0 0
        %596 = vperm.xlu0 %595, %v520
        %v597 = vpop.permute.xlu0 %596
        %600 = vset.pattern.permute.xlu0 0
        %601 = vperm.xlu0 %600, %v521
        %v602 = vpop.permute.xlu0 %601
        %605 = vset.pattern.permute.xlu0 0
        %606 = vperm.xlu0 %605, %v522
        %v607 = vpop.permute.xlu0 %606
        %610 = vset.pattern.permute.xlu0 0
        %611 = vperm.xlu0 %610, %v523
        %v612 = vpop.permute.xlu0 %611
        %615 = vset.pattern.permute.xlu0 0
        %616 = vperm.xlu0 %615, %v524
        %v617 = vpop.permute.xlu0 %616
        %620 = vset.pattern.permute.xlu0 0
        %621 = vperm.xlu0 %620, %v525
        %v622 = vpop.permute.xlu0 %621
        %625 = vset.pattern.permute.xlu0 0
        %626 = vperm.xlu0 %625, %v526
        %v627 = vpop.permute.xlu0 %626
        %630 = vset.pattern.permute.xlu0 0
        %631 = vperm.xlu0 %630, %v527
        %v632 = vpop.permute.xlu0 %631
        %635 = vset.pattern.permute.xlu0 0
        %636 = vperm.xlu0 %635, %v528
        %v637 = vpop.permute.xlu0 %636
        %640 = vset.pattern.permute.xlu0 0
        %641 = vperm.xlu0 %640, %v529
        %v642 = vpop.permute.xlu0 %641
        %645 = vset.pattern.permute.xlu0 0
        %646 = vperm.xlu0 %645, %v530
        %v647 = vpop.permute.xlu0 %646
        %vm649 = vcmask 261120
        %v651 = vsel %vm649, %v499, 0
        %v654 = vsel %vm649, %v500, 0
        %v657 = vsel %vm649, %v501, 0
        %v660 = vsel %vm649, %v502, 0
        %v663 = vsel %vm649, %v503, 0
        %v666 = vsel %vm649, %v504, 0
        %v669 = vsel %vm649, %v505, 0
        %v672 = vsel %vm649, %v506, 0
        %v675 = vsel %vm649, %v507, 0
        %v678 = vsel %vm649, %v508, 0
        %v681 = vsel %vm649, %v509, 0
        %v684 = vsel %vm649, %v510, 0
        %v687 = vsel %vm649, %v511, 0
        %v690 = vsel %vm649, %v512, 0
        %v693 = vsel %vm649, %v513, 0
        %v696 = vsel %vm649, %v514, 0
        %698 = vmatprep.subr.mxu0 0.0
        %699 = vmatpush1.msra.mxu0 0.0
        %700 = vmatprep.subr.mxu0 0.0
        %701 = vmatpush1.msra.mxu0 0.0
        %702 = vmatprep.subr.mxu0 0.0
        %703 = vmatpush1.msra.mxu0 0.0
        %704 = vmatprep.subr.mxu0 0.0
        %705 = vmatpush1.msra.mxu0 0.0
        %706 = vmatprep.subr.mxu0 0.0
        %707 = vmatpush1.msra.mxu0 0.0
        %708 = vmatprep.subr.mxu0 0.0
        %709 = vmatpush1.msra.mxu0 0.0
        %710 = vmatprep.subr.mxu0 0.0
        %711 = vmatpush1.msra.mxu0 0.0
        %712 = vmatprep.subr.mxu0 0.0
        %713 = vmatpush1.msra.mxu0 0.0
        %714 = vmatprep.subr.mxu0 0.0
        %715 = vmatpush1.msra.mxu0 0.0
        %716 = vmatprep.subr.mxu0 0.0
        %717 = vmatpush1.msra.mxu0 0.0
        %718 = vmatprep.subr.mxu0 0.0
        %719 = vmatpush1.msra.mxu0 0.0
        %720 = vmatprep.subr.mxu0 0.0
        %721 = vmatpush1.msra.mxu0 0.0
        %722 = vmatprep.subr.mxu0 0.0
        %723 = vmatpush1.msra.mxu0 %v568
        %724 = vmatprep.subr.mxu0 0.0
        %725 = vmatpush1.msra.mxu0 %v567
        %726 = vmatprep.subr.mxu0 0.0
        %727 = vmatpush1.msra.mxu0 %v566
        %728 = vmatprep.subr.mxu0 0.0
        %729 = vmatpush1.msra.mxu0 %v565
        %730 = vmatprep.subr.mxu0 0.0
        %731 = vmatpush2.msra.mxu0 0.0
        %732 = vmatprep.subr.mxu0 0.0
        %733 = vmatpush2.msra.mxu0 0.0
        %734 = vmatprep.subr.mxu0 0.0
        %735 = vmatpush2.msra.mxu0 0.0
        %736 = vmatprep.subr.mxu0 0.0
        %737 = vmatpush2.msra.mxu0 0.0
        %738 = vmatprep.subr.mxu0 0.0
        %739 = vmatpush2.msra.mxu0 0.0
        %740 = vmatprep.subr.mxu0 0.0
        %741 = vmatpush2.msra.mxu0 0.0
        %742 = vmatprep.subr.mxu0 0.0
        %743 = vmatpush2.msra.mxu0 0.0
        %744 = vmatprep.subr.mxu0 0.0
        %745 = vmatpush2.msra.mxu0 0.0
        %746 = vmatprep.subr.mxu0 0.0
        %747 = vmatpush2.msra.mxu0 0.0
        %748 = vmatprep.subr.mxu0 0.0
        %749 = vmatpush2.msra.mxu0 0.0
        %750 = vmatprep.subr.mxu0 0.0
        %751 = vmatpush2.msra.mxu0 0.0
        %752 = vmatprep.subr.mxu0 0.0
        %753 = vmatpush2.msra.mxu0 0.0
        %754 = vmatprep.subr.mxu0 0.0
        %755 = vmatpush2.msra.mxu0 0.0
        %756 = vmatprep.subr.mxu0 0.0
        %757 = vmatpush2.msra.mxu0 0.0
        %758 = vmatprep.subr.mxu0 0.0
        %759 = vmatpush2.msra.mxu0 0.0
        %760 = vmatprep.subr.mxu0 0.0
        %761 = vmatpush2.msra.mxu0 0.0
        %762 = vmatprep.mubr.f32.mxu0 0.0
        %763 = vmatmul.mubr.f32.gmra.mxu0 %v651
        %v764 = vpop.f32.mrf.mxu0
        %v765 = vadd.f32 %v572, %v764
        %v766 = vpop.f32.mrf.mxu0
        %767 = vmatprep.mubr.f32.mxu0 0.0
        %768 = vmatmul.mubr.f32.gmra.mxu0 %v654
        %v769 = vpop.f32.mrf.mxu0
        %v770 = vadd.f32 %v577, %v769
        %v771 = vpop.f32.mrf.mxu0
        %772 = vmatprep.mubr.f32.mxu0 0.0
        %773 = vmatmul.mubr.f32.gmra.mxu0 %v657
        %v774 = vpop.f32.mrf.mxu0
        %v775 = vadd.f32 %v582, %v774
        %v776 = vpop.f32.mrf.mxu0
        %777 = vmatprep.mubr.f32.mxu0 0.0
        %778 = vmatmul.mubr.f32.gmra.mxu0 %v660
        %v779 = vpop.f32.mrf.mxu0
        %v780 = vadd.f32 %v587, %v779
        %v781 = vpop.f32.mrf.mxu0
        %782 = vmatprep.mubr.f32.mxu0 0.0
        %783 = vmatmul.mubr.f32.gmra.mxu0 %v663
        %v784 = vpop.f32.mrf.mxu0
        %v785 = vadd.f32 %v592, %v784
        %v786 = vpop.f32.mrf.mxu0
        %787 = vmatprep.mubr.f32.mxu0 0.0
        %788 = vmatmul.mubr.f32.gmra.mxu0 %v666
        %v789 = vpop.f32.mrf.mxu0
        %v790 = vadd.f32 %v597, %v789
        %v791 = vpop.f32.mrf.mxu0
        %792 = vmatprep.mubr.f32.mxu0 0.0
        %793 = vmatmul.mubr.f32.gmra.mxu0 %v669
        %v794 = vpop.f32.mrf.mxu0
        %v795 = vadd.f32 %v602, %v794
        %v796 = vpop.f32.mrf.mxu0
        %797 = vmatprep.mubr.f32.mxu0 0.0
        %798 = vmatmul.mubr.f32.gmra.mxu0 %v672
        %v799 = vpop.f32.mrf.mxu0
        %v800 = vadd.f32 %v607, %v799
        %v801 = vpop.f32.mrf.mxu0
        %802 = vmatprep.mubr.f32.mxu0 0.0
        %803 = vmatmul.mubr.f32.gmra.mxu0 %v675
        %v804 = vpop.f32.mrf.mxu0
        %v805 = vadd.f32 %v612, %v804
        %v806 = vpop.f32.mrf.mxu0
        %807 = vmatprep.mubr.f32.mxu0 0.0
        %808 = vmatmul.mubr.f32.gmra.mxu0 %v678
        %v809 = vpop.f32.mrf.mxu0
        %v810 = vadd.f32 %v617, %v809
        %v811 = vpop.f32.mrf.mxu0
        %812 = vmatprep.mubr.f32.mxu0 0.0
        %813 = vmatmul.mubr.f32.gmra.mxu0 %v681
        %v814 = vpop.f32.mrf.mxu0
        %v815 = vadd.f32 %v622, %v814
        %v816 = vpop.f32.mrf.mxu0
        %817 = vmatprep.mubr.f32.mxu0 0.0
        %818 = vmatmul.mubr.f32.gmra.mxu0 %v684
        %v819 = vpop.f32.mrf.mxu0
        %v820 = vadd.f32 %v627, %v819
        %v821 = vpop.f32.mrf.mxu0
        %822 = vmatprep.mubr.f32.mxu0 0.0
        %823 = vmatmul.mubr.f32.gmra.mxu0 %v687
        %v824 = vpop.f32.mrf.mxu0
        %v825 = vadd.f32 %v632, %v824
        %v826 = vpop.f32.mrf.mxu0
        %827 = vmatprep.mubr.f32.mxu0 0.0
        %828 = vmatmul.mubr.f32.gmra.mxu0 %v690
        %v829 = vpop.f32.mrf.mxu0
        %v830 = vadd.f32 %v637, %v829
        %v831 = vpop.f32.mrf.mxu0
        %832 = vmatprep.mubr.f32.mxu0 0.0
        %833 = vmatmul.mubr.f32.gmra.mxu0 %v693
        %v834 = vpop.f32.mrf.mxu0
        %v835 = vadd.f32 %v642, %v834
        %v836 = vpop.f32.mrf.mxu0
        %837 = vmatprep.mubr.f32.mxu0 0.0
        %838 = vmatmul.mubr.f32.gmra.mxu0 %v696
        %v839 = vpop.f32.mrf.mxu0
        %v840 = vadd.f32 %v647, %v839
        %v841 = vpop.f32.mrf.mxu0
        %842 = vdwg.mxu0
        %v843 = vmax.f32 %v765, 0.0
        %v844 = vmax.f32 %v770, 0.0
        %v845 = vmax.f32 %v775, 0.0
        %v846 = vmax.f32 %v780, 0.0
        %v847 = vmax.f32 %v785, 0.0
        %v848 = vmax.f32 %v790, 0.0
        %v849 = vmax.f32 %v795, 0.0
        %v850 = vmax.f32 %v800, 0.0
        %v851 = vmax.f32 %v805, 0.0
        %v852 = vmax.f32 %v810, 0.0
        %v853 = vmax.f32 %v815, 0.0
        %v854 = vmax.f32 %v820, 0.0
        %v855 = vmax.f32 %v825, 0.0
        %v856 = vmax.f32 %v830, 0.0
        %v857 = vmax.f32 %v835, 0.0
        %v858 = vmax.f32 %v840, 0.0
        %860 = vset.pattern.permute.xlu0 0
        %861 = vperm.xlu0 %860, %v547
        %v862 = vpop.permute.xlu0 %861
        %865 = vset.pattern.permute.xlu0 0
        %866 = vperm.xlu0 %865, %v548
        %v867 = vpop.permute.xlu0 %866
        %870 = vset.pattern.permute.xlu0 0
        %871 = vperm.xlu0 %870, %v549
        %v872 = vpop.permute.xlu0 %871
        %875 = vset.pattern.permute.xlu0 0
        %876 = vperm.xlu0 %875, %v550
        %v877 = vpop.permute.xlu0 %876
        %880 = vset.pattern.permute.xlu0 0
        %881 = vperm.xlu0 %880, %v551
        %v882 = vpop.permute.xlu0 %881
        %885 = vset.pattern.permute.xlu0 0
        %886 = vperm.xlu0 %885, %v552
        %v887 = vpop.permute.xlu0 %886
        %890 = vset.pattern.permute.xlu0 0
        %891 = vperm.xlu0 %890, %v553
        %v892 = vpop.permute.xlu0 %891
        %895 = vset.pattern.permute.xlu0 0
        %896 = vperm.xlu0 %895, %v554
        %v897 = vpop.permute.xlu0 %896
        %900 = vset.pattern.permute.xlu0 0
        %901 = vperm.xlu0 %900, %v555
        %v902 = vpop.permute.xlu0 %901
        %905 = vset.pattern.permute.xlu0 0
        %906 = vperm.xlu0 %905, %v556
        %v907 = vpop.permute.xlu0 %906
        %910 = vset.pattern.permute.xlu0 0
        %911 = vperm.xlu0 %910, %v557
        %v912 = vpop.permute.xlu0 %911
        %915 = vset.pattern.permute.xlu0 0
        %916 = vperm.xlu0 %915, %v558
        %v917 = vpop.permute.xlu0 %916
        %920 = vset.pattern.permute.xlu0 0
        %921 = vperm.xlu0 %920, %v559
        %v922 = vpop.permute.xlu0 %921
        %925 = vset.pattern.permute.xlu0 0
        %926 = vperm.xlu0 %925, %v560
        %v927 = vpop.permute.xlu0 %926
        %930 = vset.pattern.permute.xlu0 0
        %931 = vperm.xlu0 %930, %v561
        %v932 = vpop.permute.xlu0 %931
        %935 = vset.pattern.permute.xlu0 0
        %936 = vperm.xlu0 %935, %v562
        %v937 = vpop.permute.xlu0 %936
        %939 = vmatprep.subr.mxu0 0.0
        %940 = vmatpush1.msra.mxu0 %v858
        %941 = vmatprep.subr.mxu0 0.0
        %942 = vmatpush1.msra.mxu0 %v857
        %943 = vmatprep.subr.mxu0 0.0
        %944 = vmatpush1.msra.mxu0 %v856
        %945 = vmatprep.subr.mxu0 0.0
        %946 = vmatpush1.msra.mxu0 %v855
        %947 = vmatprep.subr.mxu0 0.0
        %948 = vmatpush1.msra.mxu0 %v854
        %949 = vmatprep.subr.mxu0 0.0
        %950 = vmatpush1.msra.mxu0 %v853
        %951 = vmatprep.subr.mxu0 0.0
        %952 = vmatpush1.msra.mxu0 %v852
        %953 = vmatprep.subr.mxu0 0.0
        %954 = vmatpush1.msra.mxu0 %v851
        %955 = vmatprep.subr.mxu0 0.0
        %956 = vmatpush1.msra.mxu0 %v850
        %957 = vmatprep.subr.mxu0 0.0
        %958 = vmatpush1.msra.mxu0 %v849
        %959 = vmatprep.subr.mxu0 0.0
        %960 = vmatpush1.msra.mxu0 %v848
        %961 = vmatprep.subr.mxu0 0.0
        %962 = vmatpush1.msra.mxu0 %v847
        %963 = vmatprep.subr.mxu0 0.0
        %964 = vmatpush1.msra.mxu0 %v846
        %965 = vmatprep.subr.mxu0 0.0
        %966 = vmatpush1.msra.mxu0 %v845
        %967 = vmatprep.subr.mxu0 0.0
        %968 = vmatpush1.msra.mxu0 %v844
        %969 = vmatprep.subr.mxu0 0.0
        %970 = vmatpush1.msra.mxu0 %v843
        %971 = vmatprep.subr.mxu0 0.0
        %972 = vmatpush2.msra.mxu0 0.0
        %973 = vmatprep.subr.mxu0 0.0
        %974 = vmatpush2.msra.mxu0 0.0
        %975 = vmatprep.subr.mxu0 0.0
        %976 = vmatpush2.msra.mxu0 0.0
        %977 = vmatprep.subr.mxu0 0.0
        %978 = vmatpush2.msra.mxu0 0.0
        %979 = vmatprep.subr.mxu0 0.0
        %980 = vmatpush2.msra.mxu0 0.0
        %981 = vmatprep.subr.mxu0 0.0
        %982 = vmatpush2.msra.mxu0 0.0
        %983 = vmatprep.subr.mxu0 0.0
        %984 = vmatpush2.msra.mxu0 0.0
        %985 = vmatprep.subr.mxu0 0.0
        %986 = vmatpush2.msra.mxu0 0.0
        %987 = vmatprep.subr.mxu0 0.0
        %988 = vmatpush2.msra.mxu0 0.0
        %989 = vmatprep.subr.mxu0 0.0
        %990 = vmatpush2.msra.mxu0 0.0
        %991 = vmatprep.subr.mxu0 0.0
        %992 = vmatpush2.msra.mxu0 0.0
        %993 = vmatprep.subr.mxu0 0.0
        %994 = vmatpush2.msra.mxu0 0.0
        %995 = vmatprep.subr.mxu0 0.0
        %996 = vmatpush2.msra.mxu0 0.0
        %997 = vmatprep.subr.mxu0 0.0
        %998 = vmatpush2.msra.mxu0 0.0
        %999 = vmatprep.subr.mxu0 0.0
        %1000 = vmatpush2.msra.mxu0 0.0
        %1001 = vmatprep.subr.mxu0 0.0
        %1002 = vmatpush2.msra.mxu0 0.0
        %1003 = vmatprep.mubr.f32.mxu0 0.0
        %1004 = vmatmul.mubr.f32.gmra.mxu0 %v531
        %v1005 = vpop.f32.mrf.mxu0
        %v1006 = vadd.f32 %v862, %v1005
        %v1007 = vpop.f32.mrf.mxu0
        %1008 = vmatprep.mubr.f32.mxu0 0.0
        %1009 = vmatmul.mubr.f32.gmra.mxu0 %v532
        %v1010 = vpop.f32.mrf.mxu0
        %v1011 = vadd.f32 %v867, %v1010
        %v1012 = vpop.f32.mrf.mxu0
        %1013 = vmatprep.mubr.f32.mxu0 0.0
        %1014 = vmatmul.mubr.f32.gmra.mxu0 %v533
        %v1015 = vpop.f32.mrf.mxu0
        %v1016 = vadd.f32 %v872, %v1015
        %v1017 = vpop.f32.mrf.mxu0
        %1018 = vmatprep.mubr.f32.mxu0 0.0
        %1019 = vmatmul.mubr.f32.gmra.mxu0 %v534
        %v1020 = vpop.f32.mrf.mxu0
        %v1021 = vadd.f32 %v877, %v1020
        %v1022 = vpop.f32.mrf.mxu0
        %1023 = vmatprep.mubr.f32.mxu0 0.0
        %1024 = vmatmul.mubr.f32.gmra.mxu0 %v535
        %v1025 = vpop.f32.mrf.mxu0
        %v1026 = vadd.f32 %v882, %v1025
        %v1027 = vpop.f32.mrf.mxu0
        %1028 = vmatprep.mubr.f32.mxu0 0.0
        %1029 = vmatmul.mubr.f32.gmra.mxu0 %v536
        %v1030 = vpop.f32.mrf.mxu0
        %v1031 = vadd.f32 %v887, %v1030
        %v1032 = vpop.f32.mrf.mxu0
        %1033 = vmatprep.mubr.f32.mxu0 0.0
        %1034 = vmatmul.mubr.f32.gmra.mxu0 %v537
        %v1035 = vpop.f32.mrf.mxu0
        %v1036 = vadd.f32 %v892, %v1035
        %v1037 = vpop.f32.mrf.mxu0
        %1038 = vmatprep.mubr.f32.mxu0 0.0
        %1039 = vmatmul.mubr.f32.gmra.mxu0 %v538
        %v1040 = vpop.f32.mrf.mxu0
        %v1041 = vadd.f32 %v897, %v1040
        %v1042 = vpop.f32.mrf.mxu0
        %1043 = vmatprep.mubr.f32.mxu0 0.0
        %1044 = vmatmul.mubr.f32.gmra.mxu0 %v539
        %v1045 = vpop.f32.mrf.mxu0
        %v1046 = vadd.f32 %v902, %v1045
        %v1047 = vpop.f32.mrf.mxu0
        %1048 = vmatprep.mubr.f32.mxu0 0.0
        %1049 = vmatmul.mubr.f32.gmra.mxu0 %v540
        %v1050 = vpop.f32.mrf.mxu0
        %v1051 = vadd.f32 %v907, %v1050
        %v1052 = vpop.f32.mrf.mxu0
        %1053 = vmatprep.mubr.f32.mxu0 0.0
        %1054 = vmatmul.mubr.f32.gmra.mxu0 %v541
        %v1055 = vpop.f32.mrf.mxu0
        %v1056 = vadd.f32 %v912, %v1055
        %v1057 = vpop.f32.mrf.mxu0
        %1058 = vmatprep.mubr.f32.mxu0 0.0
        %1059 = vmatmul.mubr.f32.gmra.mxu0 %v542
        %v1060 = vpop.f32.mrf.mxu0
        %v1061 = vadd.f32 %v917, %v1060
        %v1062 = vpop.f32.mrf.mxu0
        %1063 = vmatprep.mubr.f32.mxu0 0.0
        %1064 = vmatmul.mubr.f32.gmra.mxu0 %v543
        %v1065 = vpop.f32.mrf.mxu0
        %v1066 = vadd.f32 %v922, %v1065
        %v1067 = vpop.f32.mrf.mxu0
        %1068 = vmatprep.mubr.f32.mxu0 0.0
        %1069 = vmatmul.mubr.f32.gmra.mxu0 %v544
        %v1070 = vpop.f32.mrf.mxu0
        %v1071 = vadd.f32 %v927, %v1070
        %v1072 = vpop.f32.mrf.mxu0
        %1073 = vmatprep.mubr.f32.mxu0 0.0
        %1074 = vmatmul.mubr.f32.gmra.mxu0 %v545
        %v1075 = vpop.f32.mrf.mxu0
        %v1076 = vadd.f32 %v932, %v1075
        %v1077 = vpop.f32.mrf.mxu0
        %1078 = vmatprep.mubr.f32.mxu0 0.0
        %1079 = vmatmul.mubr.f32.gmra.mxu0 %v546
        %v1080 = vpop.f32.mrf.mxu0
        %v1081 = vadd.f32 %v937, %v1080
        %v1082 = vpop.f32.mrf.mxu0
        %1083 = vdwg.mxu0
        %v1084 = vmax.f32 %v1006, 0.0
        %v1085 = vmax.f32 %v1011, 0.0
        %v1086 = vmax.f32 %v1016, 0.0
        %v1087 = vmax.f32 %v1021, 0.0
        %v1088 = vmax.f32 %v1026, 0.0
        %v1089 = vmax.f32 %v1031, 0.0
        %v1090 = vmax.f32 %v1036, 0.0
        %v1091 = vmax.f32 %v1041, 0.0
        %v1092 = vmax.f32 %v1046, 0.0
        %v1093 = vmax.f32 %v1051, 0.0
        %v1094 = vmax.f32 %v1056, 0.0
        %v1095 = vmax.f32 %v1061, 0.0
        %v1096 = vmax.f32 %v1066, 0.0
        %v1097 = vmax.f32 %v1071, 0.0
        %v1098 = vmax.f32 %v1076, 0.0
        %v1099 = vmax.f32 %v1081, 0.0
        %1101 = vset.pattern.permute.xlu0 0
        %1102 = vperm.xlu0 %1101, %v564
        %v1103 = vpop.permute.xlu0 %1102
        %1105 = vmatprep.subr.mxu0 0.0
        %1106 = vmatpush1.msra.mxu0 %v1099
        %1107 = vmatprep.subr.mxu0 0.0
        %1108 = vmatpush1.msra.mxu0 %v1098
        %1109 = vmatprep.subr.mxu0 0.0
        %1110 = vmatpush1.msra.mxu0 %v1097
        %1111 = vmatprep.subr.mxu0 0.0
        %1112 = vmatpush1.msra.mxu0 %v1096
        %1113 = vmatprep.subr.mxu0 0.0
        %1114 = vmatpush1.msra.mxu0 %v1095
        %1115 = vmatprep.subr.mxu0 0.0
        %1116 = vmatpush1.msra.mxu0 %v1094
        %1117 = vmatprep.subr.mxu0 0.0
        %1118 = vmatpush1.msra.mxu0 %v1093
        %1119 = vmatprep.subr.mxu0 0.0
        %1120 = vmatpush1.msra.mxu0 %v1092
        %1121 = vmatprep.subr.mxu0 0.0
        %1122 = vmatpush1.msra.mxu0 %v1091
        %1123 = vmatprep.subr.mxu0 0.0
        %1124 = vmatpush1.msra.mxu0 %v1090
        %1125 = vmatprep.subr.mxu0 0.0
        %1126 = vmatpush1.msra.mxu0 %v1089
        %1127 = vmatprep.subr.mxu0 0.0
        %1128 = vmatpush1.msra.mxu0 %v1088
        %1129 = vmatprep.subr.mxu0 0.0
        %1130 = vmatpush1.msra.mxu0 %v1087
        %1131 = vmatprep.subr.mxu0 0.0
        %1132 = vmatpush1.msra.mxu0 %v1086
        %1133 = vmatprep.subr.mxu0 0.0
        %1134 = vmatpush1.msra.mxu0 %v1085
        %1135 = vmatprep.subr.mxu0 0.0
        %1136 = vmatpush1.msra.mxu0 %v1084
        %1137 = vmatprep.subr.mxu0 0.0
        %1138 = vmatpush2.msra.mxu0 0.0
        %1139 = vmatprep.subr.mxu0 0.0
        %1140 = vmatpush2.msra.mxu0 0.0
        %1141 = vmatprep.subr.mxu0 0.0
        %1142 = vmatpush2.msra.mxu0 0.0
        %1143 = vmatprep.subr.mxu0 0.0
        %1144 = vmatpush2.msra.mxu0 0.0
        %1145 = vmatprep.subr.mxu0 0.0
        %1146 = vmatpush2.msra.mxu0 0.0
        %1147 = vmatprep.subr.mxu0 0.0
        %1148 = vmatpush2.msra.mxu0 0.0
        %1149 = vmatprep.subr.mxu0 0.0
        %1150 = vmatpush2.msra.mxu0 0.0
        %1151 = vmatprep.subr.mxu0 0.0
        %1152 = vmatpush2.msra.mxu0 0.0
        %1153 = vmatprep.subr.mxu0 0.0
        %1154 = vmatpush2.msra.mxu0 0.0
        %1155 = vmatprep.subr.mxu0 0.0
        %1156 = vmatpush2.msra.mxu0 0.0
        %1157 = vmatprep.subr.mxu0 0.0
        %1158 = vmatpush2.msra.mxu0 0.0
        %1159 = vmatprep.subr.mxu0 0.0
        %1160 = vmatpush2.msra.mxu0 0.0
        %1161 = vmatprep.subr.mxu0 0.0
        %1162 = vmatpush2.msra.mxu0 0.0
        %1163 = vmatprep.subr.mxu0 0.0
        %1164 = vmatpush2.msra.mxu0 0.0
        %1165 = vmatprep.subr.mxu0 0.0
        %1166 = vmatpush2.msra.mxu0 0.0
        %1167 = vmatprep.subr.mxu0 0.0
        %1168 = vmatpush2.msra.mxu0 0.0
        %1169 = vmatprep.mubr.f32.mxu0 0.0
        %1170 = vmatmul.mubr.f32.gmra.mxu0 %v563
        %v1171 = vpop.f32.mrf.mxu0
        %v1172 = vadd.f32 %v1103, %v1171
        %v1173 = vpop.f32.mrf.mxu0
        %1174 = vdwg.mxu0
        %v1175 = vld [vmem:[%s449] sm:$0xff]
        %v1176 = vld [vmem:[%s449 + $0x8] sm:$0xff]
        %v1177 = vld [vmem:[%s449 + $0x10] sm:$0xff]
        %v1178 = vld [vmem:[%s449 + $0x18] sm:$0xff]
        %1179 = vmatprep.subr.mxu0 0.0
        %1180 = vmatpush1.msra.mxu0 0.0
        %1181 = vmatprep.subr.mxu0 0.0
        %1182 = vmatpush1.msra.mxu0 0.0
        %1183 = vmatprep.subr.mxu0 0.0
        %1184 = vmatpush1.msra.mxu0 0.0
        %1185 = vmatprep.subr.mxu0 0.0
        %1186 = vmatpush1.msra.mxu0 0.0
        %1187 = vmatprep.subr.mxu0 0.0
        %1188 = vmatpush1.msra.mxu0 0.0
        %1189 = vmatprep.subr.mxu0 0.0
        %1190 = vmatpush1.msra.mxu0 0.0
        %1191 = vmatprep.subr.mxu0 0.0
        %1192 = vmatpush1.msra.mxu0 0.0
        %1193 = vmatprep.subr.mxu0 0.0
        %1194 = vmatpush1.msra.mxu0 0.0
        %1195 = vmatprep.subr.mxu0 0.0
        %1196 = vmatpush1.msra.mxu0 0.0
        %1197 = vmatprep.subr.mxu0 0.0
        %1198 = vmatpush1.msra.mxu0 0.0
        %1199 = vmatprep.subr.mxu0 0.0
        %1200 = vmatpush1.msra.mxu0 0.0
        %1201 = vmatprep.subr.mxu0 0.0
        %1202 = vmatpush1.msra.mxu0 0.0
        %1203 = vmatprep.subr.mxu0 0.0
        %1204 = vmatpush1.msra.mxu0 %v1178
        %1205 = vmatprep.subr.mxu0 0.0
        %1206 = vmatpush1.msra.mxu0 %v1177
        %1207 = vmatprep.subr.mxu0 0.0
        %1208 = vmatpush1.msra.mxu0 %v1176
        %1209 = vmatprep.subr.mxu0 0.0
        %1210 = vmatpush1.msra.mxu0 %v1175
        %1211 = vmatprep.subr.mxu0 0.0
        %1212 = vmatpush2.msra.mxu0 0.0
        %1213 = vmatprep.subr.mxu0 0.0
        %1214 = vmatpush2.msra.mxu0 0.0
        %1215 = vmatprep.subr.mxu0 0.0
        %1216 = vmatpush2.msra.mxu0 0.0
        %1217 = vmatprep.subr.mxu0 0.0
        %1218 = vmatpush2.msra.mxu0 0.0
        %1219 = vmatprep.subr.mxu0 0.0
        %1220 = vmatpush2.msra.mxu0 0.0
        %1221 = vmatprep.subr.mxu0 0.0
        %1222 = vmatpush2.msra.mxu0 0.0
        %1223 = vmatprep.subr.mxu0 0.0
        %1224 = vmatpush2.msra.mxu0 0.0
        %1225 = vmatprep.subr.mxu0 0.0
        %1226 = vmatpush2.msra.mxu0 0.0
        %1227 = vmatprep.subr.mxu0 0.0
        %1228 = vmatpush2.msra.mxu0 0.0
        %1229 = vmatprep.subr.mxu0 0.0
        %1230 = vmatpush2.msra.mxu0 0.0
        %1231 = vmatprep.subr.mxu0 0.0
        %1232 = vmatpush2.msra.mxu0 0.0
        %1233 = vmatprep.subr.mxu0 0.0
        %1234 = vmatpush2.msra.mxu0 0.0
        %1235 = vmatprep.subr.mxu0 0.0
        %1236 = vmatpush2.msra.mxu0 0.0
        %1237 = vmatprep.subr.mxu0 0.0
        %1238 = vmatpush2.msra.mxu0 0.0
        %1239 = vmatprep.subr.mxu0 0.0
        %1240 = vmatpush2.msra.mxu0 0.0
        %1241 = vmatprep.subr.mxu0 0.0
        %1242 = vmatpush2.msra.mxu0 0.0
        %1243 = vmatprep.mubr.f32.mxu0 0.0
        %1244 = vmatmul.mubr.f32.gmra.mxu0 %v651
        %v1245 = vpop.f32.mrf.mxu0
        %v1246 = vadd.f32 %v572, %v1245
        %v1247 = vpop.f32.mrf.mxu0
        %1248 = vmatprep.mubr.f32.mxu0 0.0
        %1249 = vmatmul.mubr.f32.gmra.mxu0 %v654
        %v1250 = vpop.f32.mrf.mxu0
        %v1251 = vadd.f32 %v577, %v1250
        %v1252 = vpop.f32.mrf.mxu0
        %1253 = vmatprep.mubr.f32.mxu0 0.0
        %1254 = vmatmul.mubr.f32.gmra.mxu0 %v657
        %v1255 = vpop.f32.mrf.mxu0
        %v1256 = vadd.f32 %v582, %v1255
        %v1257 = vpop.f32.mrf.mxu0
        %1258 = vmatprep.mubr.f32.mxu0 0.0
        %1259 = vmatmul.mubr.f32.gmra.mxu0 %v660
        %v1260 = vpop.f32.mrf.mxu0
        %v1261 = vadd.f32 %v587, %v1260
        %v1262 = vpop.f32.mrf.mxu0
        %1263 = vmatprep.mubr.f32.mxu0 0.0
        %1264 = vmatmul.mubr.f32.gmra.mxu0 %v663
        %v1265 = vpop.f32.mrf.mxu0
        %v1266 = vadd.f32 %v592, %v1265
        %v1267 = vpop.f32.mrf.mxu0
        %1268 = vmatprep.mubr.f32.mxu0 0.0
        %1269 = vmatmul.mubr.f32.gmra.mxu0 %v666
        %v1270 = vpop.f32.mrf.mxu0
        %v1271 = vadd.f32 %v597, %v1270
        %v1272 = vpop.f32.mrf.mxu0
        %1273 = vmatprep.mubr.f32.mxu0 0.0
        %1274 = vmatmul.mubr.f32.gmra.mxu0 %v669
        %v1275 = vpop.f32.mrf.mxu0
        %v1276 = vadd.f32 %v602, %v1275
        %v1277 = vpop.f32.mrf.mxu0
        %1278 = vmatprep.mubr.f32.mxu0 0.0
        %1279 = vmatmul.mubr.f32.gmra.mxu0 %v672
        %v1280 = vpop.f32.mrf.mxu0
        %v1281 = vadd.f32 %v607, %v1280
        %v1282 = vpop.f32.mrf.mxu0
        %1283 = vmatprep.mubr.f32.mxu0 0.0
        %1284 = vmatmul.mubr.f32.gmra.mxu0 %v675
        %v1285 = vpop.f32.mrf.mxu0
        %v1286 = vadd.f32 %v612, %v1285
        %v1287 = vpop.f32.mrf.mxu0
        %1288 = vmatprep.mubr.f32.mxu0 0.0
        %1289 = vmatmul.mubr.f32.gmra.mxu0 %v678
        %v1290 = vpop.f32.mrf.mxu0
        %v1291 = vadd.f32 %v617, %v1290
        %v1292 = vpop.f32.mrf.mxu0
        %1293 = vmatprep.mubr.f32.mxu0 0.0
        %1294 = vmatmul.mubr.f32.gmra.mxu0 %v681
        %v1295 = vpop.f32.mrf.mxu0
        %v1296 = vadd.f32 %v622, %v1295
        %v1297 = vpop.f32.mrf.mxu0
        %1298 = vmatprep.mubr.f32.mxu0 0.0
        %1299 = vmatmul.mubr.f32.gmra.mxu0 %v684
        %v1300 = vpop.f32.mrf.mxu0
        %v1301 = vadd.f32 %v627, %v1300
        %v1302 = vpop.f32.mrf.mxu0
        %1303 = vmatprep.mubr.f32.mxu0 0.0
        %1304 = vmatmul.mubr.f32.gmra.mxu0 %v687
        %v1305 = vpop.f32.mrf.mxu0
        %v1306 = vadd.f32 %v632, %v1305
        %v1307 = vpop.f32.mrf.mxu0
        %1308 = vmatprep.mubr.f32.mxu0 0.0
        %1309 = vmatmul.mubr.f32.gmra.mxu0 %v690
        %v1310 = vpop.f32.mrf.mxu0
        %v1311 = vadd.f32 %v637, %v1310
        %v1312 = vpop.f32.mrf.mxu0
        %1313 = vmatprep.mubr.f32.mxu0 0.0
        %1314 = vmatmul.mubr.f32.gmra.mxu0 %v693
        %v1315 = vpop.f32.mrf.mxu0
        %v1316 = vadd.f32 %v642, %v1315
        %v1317 = vpop.f32.mrf.mxu0
        %1318 = vmatprep.mubr.f32.mxu0 0.0
        %1319 = vmatmul.mubr.f32.gmra.mxu0 %v696
        %v1320 = vpop.f32.mrf.mxu0
        %v1321 = vadd.f32 %v647, %v1320
        %v1322 = vpop.f32.mrf.mxu0
        %1323 = vdwg.mxu0
        %v1324 = vmax.f32 %v1246, 0.0
        %v1325 = vmax.f32 %v1251, 0.0
        %v1326 = vmax.f32 %v1256, 0.0
        %v1327 = vmax.f32 %v1261, 0.0
        %v1328 = vmax.f32 %v1266, 0.0
        %v1329 = vmax.f32 %v1271, 0.0
        %v1330 = vmax.f32 %v1276, 0.0
        %v1331 = vmax.f32 %v1281, 0.0
        %v1332 = vmax.f32 %v1286, 0.0
        %v1333 = vmax.f32 %v1291, 0.0
        %v1334 = vmax.f32 %v1296, 0.0
        %v1335 = vmax.f32 %v1301, 0.0
        %v1336 = vmax.f32 %v1306, 0.0
        %v1337 = vmax.f32 %v1311, 0.0
        %v1338 = vmax.f32 %v1316, 0.0
        %v1339 = vmax.f32 %v1321, 0.0
        %1340 = vmatprep.subr.mxu0 0.0
        %1341 = vmatpush1.msra.mxu0 %v1339
        %1342 = vmatprep.subr.mxu0 0.0
        %1343 = vmatpush1.msra.mxu0 %v1338
        %1344 = vmatprep.subr.mxu0 0.0
        %1345 = vmatpush1.msra.mxu0 %v1337
        %1346 = vmatprep.subr.mxu0 0.0
        %1347 = vmatpush1.msra.mxu0 %v1336
        %1348 = vmatprep.subr.mxu0 0.0
        %1349 = vmatpush1.msra.mxu0 %v1335
        %1350 = vmatprep.subr.mxu0 0.0
        %1351 = vmatpush1.msra.mxu0 %v1334
        %1352 = vmatprep.subr.mxu0 0.0
        %1353 = vmatpush1.msra.mxu0 %v1333
        %1354 = vmatprep.subr.mxu0 0.0
        %1355 = vmatpush1.msra.mxu0 %v1332
        %1356 = vmatprep.subr.mxu0 0.0
        %1357 = vmatpush1.msra.mxu0 %v1331
        %1358 = vmatprep.subr.mxu0 0.0
        %1359 = vmatpush1.msra.mxu0 %v1330
        %1360 = vmatprep.subr.mxu0 0.0
        %1361 = vmatpush1.msra.mxu0 %v1329
        %1362 = vmatprep.subr.mxu0 0.0
        %1363 = vmatpush1.msra.mxu0 %v1328
        %1364 = vmatprep.subr.mxu0 0.0
        %1365 = vmatpush1.msra.mxu0 %v1327
        %1366 = vmatprep.subr.mxu0 0.0
        %1367 = vmatpush1.msra.mxu0 %v1326
        %1368 = vmatprep.subr.mxu0 0.0
        %1369 = vmatpush1.msra.mxu0 %v1325
        %1370 = vmatprep.subr.mxu0 0.0
        %1371 = vmatpush1.msra.mxu0 %v1324
        %1372 = vmatprep.subr.mxu0 0.0
        %1373 = vmatpush2.msra.mxu0 0.0
        %1374 = vmatprep.subr.mxu0 0.0
        %1375 = vmatpush2.msra.mxu0 0.0
        %1376 = vmatprep.subr.mxu0 0.0
        %1377 = vmatpush2.msra.mxu0 0.0
        %1378 = vmatprep.subr.mxu0 0.0
        %1379 = vmatpush2.msra.mxu0 0.0
        %1380 = vmatprep.subr.mxu0 0.0
        %1381 = vmatpush2.msra.mxu0 0.0
        %1382 = vmatprep.subr.mxu0 0.0
        %1383 = vmatpush2.msra.mxu0 0.0
        %1384 = vmatprep.subr.mxu0 0.0
        %1385 = vmatpush2.msra.mxu0 0.0
        %1386 = vmatprep.subr.mxu0 0.0
        %1387 = vmatpush2.msra.mxu0 0.0
        %1388 = vmatprep.subr.mxu0 0.0
        %1389 = vmatpush2.msra.mxu0 0.0
        %1390 = vmatprep.subr.mxu0 0.0
        %1391 = vmatpush2.msra.mxu0 0.0
        %1392 = vmatprep.subr.mxu0 0.0
        %1393 = vmatpush2.msra.mxu0 0.0
        %1394 = vmatprep.subr.mxu0 0.0
        %1395 = vmatpush2.msra.mxu0 0.0
        %1396 = vmatprep.subr.mxu0 0.0
        %1397 = vmatpush2.msra.mxu0 0.0
        %1398 = vmatprep.subr.mxu0 0.0
        %1399 = vmatpush2.msra.mxu0 0.0
        %1400 = vmatprep.subr.mxu0 0.0
        %1401 = vmatpush2.msra.mxu0 0.0
        %1402 = vmatprep.subr.mxu0 0.0
        %1403 = vmatpush2.msra.mxu0 0.0
        %1404 = vmatprep.mubr.f32.mxu0 0.0
        %1405 = vmatmul.mubr.f32.gmra.mxu0 %v531
        %v1406 = vpop.f32.mrf.mxu0
        %v1407 = vadd.f32 %v862, %v1406
        %v1408 = vpop.f32.mrf.mxu0
        %1409 = vmatprep.mubr.f32.mxu0 0.0
        %1410 = vmatmul.mubr.f32.gmra.mxu0 %v532
        %v1411 = vpop.f32.mrf.mxu0
        %v1412 = vadd.f32 %v867, %v1411
        %v1413 = vpop.f32.mrf.mxu0
        %1414 = vmatprep.mubr.f32.mxu0 0.0
        %1415 = vmatmul.mubr.f32.gmra.mxu0 %v533
        %v1416 = vpop.f32.mrf.mxu0
        %v1417 = vadd.f32 %v872, %v1416
        %v1418 = vpop.f32.mrf.mxu0
        %1419 = vmatprep.mubr.f32.mxu0 0.0
        %1420 = vmatmul.mubr.f32.gmra.mxu0 %v534
        %v1421 = vpop.f32.mrf.mxu0
        %v1422 = vadd.f32 %v877, %v1421
        %v1423 = vpop.f32.mrf.mxu0
        %1424 = vmatprep.mubr.f32.mxu0 0.0
        %1425 = vmatmul.mubr.f32.gmra.mxu0 %v535
        %v1426 = vpop.f32.mrf.mxu0
        %v1427 = vadd.f32 %v882, %v1426
        %v1428 = vpop.f32.mrf.mxu0
        %1429 = vmatprep.mubr.f32.mxu0 0.0
        %1430 = vmatmul.mubr.f32.gmra.mxu0 %v536
        %v1431 = vpop.f32.mrf.mxu0
        %v1432 = vadd.f32 %v887, %v1431
        %v1433 = vpop.f32.mrf.mxu0
        %1434 = vmatprep.mubr.f32.mxu0 0.0
        %1435 = vmatmul.mubr.f32.gmra.mxu0 %v537
        %v1436 = vpop.f32.mrf.mxu0
        %v1437 = vadd.f32 %v892, %v1436
        %v1438 = vpop.f32.mrf.mxu0
        %1439 = vmatprep.mubr.f32.mxu0 0.0
        %1440 = vmatmul.mubr.f32.gmra.mxu0 %v538
        %v1441 = vpop.f32.mrf.mxu0
        %v1442 = vadd.f32 %v897, %v1441
        %v1443 = vpop.f32.mrf.mxu0
        %1444 = vmatprep.mubr.f32.mxu0 0.0
        %1445 = vmatmul.mubr.f32.gmra.mxu0 %v539
        %v1446 = vpop.f32.mrf.mxu0
        %v1447 = vadd.f32 %v902, %v1446
        %v1448 = vpop.f32.mrf.mxu0
        %1449 = vmatprep.mubr.f32.mxu0 0.0
        %1450 = vmatmul.mubr.f32.gmra.mxu0 %v540
        %v1451 = vpop.f32.mrf.mxu0
        %v1452 = vadd.f32 %v907, %v1451
        %v1453 = vpop.f32.mrf.mxu0
        %1454 = vmatprep.mubr.f32.mxu0 0.0
        %1455 = vmatmul.mubr.f32.gmra.mxu0 %v541
        %v1456 = vpop.f32.mrf.mxu0
        %v1457 = vadd.f32 %v912, %v1456
        %v1458 = vpop.f32.mrf.mxu0
        %1459 = vmatprep.mubr.f32.mxu0 0.0
        %1460 = vmatmul.mubr.f32.gmra.mxu0 %v542
        %v1461 = vpop.f32.mrf.mxu0
        %v1462 = vadd.f32 %v917, %v1461
        %v1463 = vpop.f32.mrf.mxu0
        %1464 = vmatprep.mubr.f32.mxu0 0.0
        %1465 = vmatmul.mubr.f32.gmra.mxu0 %v543
        %v1466 = vpop.f32.mrf.mxu0
        %v1467 = vadd.f32 %v922, %v1466
        %v1468 = vpop.f32.mrf.mxu0
        %1469 = vmatprep.mubr.f32.mxu0 0.0
        %1470 = vmatmul.mubr.f32.gmra.mxu0 %v544
        %v1471 = vpop.f32.mrf.mxu0
        %v1472 = vadd.f32 %v927, %v1471
        %v1473 = vpop.f32.mrf.mxu0
        %1474 = vmatprep.mubr.f32.mxu0 0.0
        %1475 = vmatmul.mubr.f32.gmra.mxu0 %v545
        %v1476 = vpop.f32.mrf.mxu0
        %v1477 = vadd.f32 %v932, %v1476
        %v1478 = vpop.f32.mrf.mxu0
        %1479 = vmatprep.mubr.f32.mxu0 0.0
        %1480 = vmatmul.mubr.f32.gmra.mxu0 %v546
        %v1481 = vpop.f32.mrf.mxu0
        %v1482 = vadd.f32 %v937, %v1481
        %v1483 = vpop.f32.mrf.mxu0
        %1484 = vdwg.mxu0
        %v1485 = vmax.f32 %v1407, 0.0
        %v1486 = vmax.f32 %v1412, 0.0
        %v1487 = vmax.f32 %v1417, 0.0
        %v1488 = vmax.f32 %v1422, 0.0
        %v1489 = vmax.f32 %v1427, 0.0
        %v1490 = vmax.f32 %v1432, 0.0
        %v1491 = vmax.f32 %v1437, 0.0
        %v1492 = vmax.f32 %v1442, 0.0
        %v1493 = vmax.f32 %v1447, 0.0
        %v1494 = vmax.f32 %v1452, 0.0
        %v1495 = vmax.f32 %v1457, 0.0
        %v1496 = vmax.f32 %v1462, 0.0
        %v1497 = vmax.f32 %v1467, 0.0
        %v1498 = vmax.f32 %v1472, 0.0
        %v1499 = vmax.f32 %v1477, 0.0
        %v1500 = vmax.f32 %v1482, 0.0
        %1501 = vmatprep.subr.mxu0 0.0
        %1502 = vmatpush1.msra.mxu0 %v1500
        %1503 = vmatprep.subr.mxu0 0.0
        %1504 = vmatpush1.msra.mxu0 %v1499
        %1505 = vmatprep.subr.mxu0 0.0
        %1506 = vmatpush1.msra.mxu0 %v1498
        %1507 = vmatprep.subr.mxu0 0.0
        %1508 = vmatpush1.msra.mxu0 %v1497
        %1509 = vmatprep.subr.mxu0 0.0
        %1510 = vmatpush1.msra.mxu0 %v1496
        %1511 = vmatprep.subr.mxu0 0.0
        %1512 = vmatpush1.msra.mxu0 %v1495
        %1513 = vmatprep.subr.mxu0 0.0
        %1514 = vmatpush1.msra.mxu0 %v1494
        %1515 = vmatprep.subr.mxu0 0.0
        %1516 = vmatpush1.msra.mxu0 %v1493
        %1517 = vmatprep.subr.mxu0 0.0
        %1518 = vmatpush1.msra.mxu0 %v1492
        %1519 = vmatprep.subr.mxu0 0.0
        %1520 = vmatpush1.msra.mxu0 %v1491
        %1521 = vmatprep.subr.mxu0 0.0
        %1522 = vmatpush1.msra.mxu0 %v1490
        %1523 = vmatprep.subr.mxu0 0.0
        %1524 = vmatpush1.msra.mxu0 %v1489
        %1525 = vmatprep.subr.mxu0 0.0
        %1526 = vmatpush1.msra.mxu0 %v1488
        %1527 = vmatprep.subr.mxu0 0.0
        %1528 = vmatpush1.msra.mxu0 %v1487
        %1529 = vmatprep.subr.mxu0 0.0
        %1530 = vmatpush1.msra.mxu0 %v1486
        %1531 = vmatprep.subr.mxu0 0.0
        %1532 = vmatpush1.msra.mxu0 %v1485
        %1533 = vmatprep.subr.mxu0 0.0
        %1534 = vmatpush2.msra.mxu0 0.0
        %1535 = vmatprep.subr.mxu0 0.0
        %1536 = vmatpush2.msra.mxu0 0.0
        %1537 = vmatprep.subr.mxu0 0.0
        %1538 = vmatpush2.msra.mxu0 0.0
        %1539 = vmatprep.subr.mxu0 0.0
        %1540 = vmatpush2.msra.mxu0 0.0
        %1541 = vmatprep.subr.mxu0 0.0
        %1542 = vmatpush2.msra.mxu0 0.0
        %1543 = vmatprep.subr.mxu0 0.0
        %1544 = vmatpush2.msra.mxu0 0.0
        %1545 = vmatprep.subr.mxu0 0.0
        %1546 = vmatpush2.msra.mxu0 0.0
        %1547 = vmatprep.subr.mxu0 0.0
        %1548 = vmatpush2.msra.mxu0 0.0
        %1549 = vmatprep.subr.mxu0 0.0
        %1550 = vmatpush2.msra.mxu0 0.0
        %1551 = vmatprep.subr.mxu0 0.0
        %1552 = vmatpush2.msra.mxu0 0.0
        %1553 = vmatprep.subr.mxu0 0.0
        %1554 = vmatpush2.msra.mxu0 0.0
        %1555 = vmatprep.subr.mxu0 0.0
        %1556 = vmatpush2.msra.mxu0 0.0
        %1557 = vmatprep.subr.mxu0 0.0
        %1558 = vmatpush2.msra.mxu0 0.0
        %1559 = vmatprep.subr.mxu0 0.0
        %1560 = vmatpush2.msra.mxu0 0.0
        %1561 = vmatprep.subr.mxu0 0.0
        %1562 = vmatpush2.msra.mxu0 0.0
        %1563 = vmatprep.subr.mxu0 0.0
        %1564 = vmatpush2.msra.mxu0 0.0
        %1565 = vmatprep.mubr.f32.mxu0 0.0
        %1566 = vmatmul.mubr.f32.gmra.mxu0 %v563
        %v1567 = vpop.f32.mrf.mxu0
        %v1568 = vadd.f32 %v1103, %v1567
        %v1569 = vpop.f32.mrf.mxu0
        %1570 = vdwg.mxu0
        %v1571 = vld [vmem:[%s495] sm:$0x1]
        %v1572 = vsub.f32 1.0, %v1571
        %v1573 = vmul.f32 %v1572, 0.99
        %v1576 = vunpack.c.l.s4 1966171168
        %v1577 = vunpack.c.0.s8 %v1576
        %v1578 = vlaneseq
        %v1579 = vshrl.u32 %v1578, 7
        %v1580 = vsub.s32 %v1577, %v1579
        %v1581 = vrot.slane %v1568, %v1580
        %v1582 = vcombine.high %v1581, %v1581
        %v1584 = vunpack.c.l.s4 1966171168
        %v1585 = vunpack.c.0.s8 %v1584
        %v1586 = vlaneseq
        %v1587 = vshrl.u32 %v1586, 7
        %v1588 = vsub.s32 %v1585, %v1587
        %v1589 = vrot.slane %v1582, %v1588
        %v1591 = vmul.f32 %v1573, %v1589
        %v1592 = vadd.f32 %v1172, %v1591
        %v1594 = vrot.slane %v1172, 1
        %v1596 = vsub.f32 %v1592, %v1594
        %v1597 = vld [vmem:[%s498] sm:$0x1]
        %v1598 = vsub.f32 %v1596, %v1597
        %1599 = vst [vmem:[%s492] sm:$0x1] %v1598
        %s1600 = sand.u32 %s262, 1
        %s1601 = scalar_lea.sflag [#allocation5], %s1600
        %s1602 = sand.u32 %s262, 1
        %s1603 = scalar_lea.vmem [#allocation4], %s1602
        // Predicated region
        $region137: #{tpu_custom_call.1} parent=127 // pred_check
          %p1604 = pneg %p272
        $region138: #{tpu_custom_call.1} parent=127 // pred_check_branch
          %1606 = sbr.rel (%p1604) target = $region140
        $region139: #{tpu_custom_call.1} parent=127 // pred_region
          %s1608 = ssub.s32 16, 16
          %1609 = vsyncadd %s1601, %s1608
          %s1610 = smul.addr %s24, 16
          %s1611 = scalar_lea.hbm %s10, %s1610
          %s1613 = sshll.u32 %s1603, 4
          %s1614 = int_to_ptr.vmem [resolvable:$true] %s1613
          %1616 = dma.vmem_to_hbm [thread:$0]  %s1614, 16, %s1611, %s1601
        $region140: #{tpu_custom_call.1} parent=127 // pred_fallthru
          _
      $region128: #{tpu_custom_call.1} parent=5 // pred_fallthru
        _
      %p1617 = scmp.le.s32.totalorder 2, %s19
      // Predicated region
      $region141: #{tpu_custom_call.1} parent=5 // pred_check
        %p1618 = pneg %p1617
      $region142: #{tpu_custom_call.1} parent=5 // pred_check_branch
        %1620 = sbr.rel (%p1618) target = $region144
      $region143: #{tpu_custom_call.1} parent=5 // pred_region
        %s1621 = ssub.s32 %s19, 2
        // Predicated region
        $region145: #{tpu_custom_call.1} parent=143 // pred_check
          %p1622 = pneg %p278
        $region146: #{tpu_custom_call.1} parent=143 // pred_check_branch
          %1624 = sbr.rel (%p1622) target = $region148
        $region147: #{tpu_custom_call.1} parent=143 // pred_region
          %s1625 = sand.u32 %s263, 1
          %s1626 = scalar_lea.sflag [#allocation5], %s1625
          %s1627 = sand.u32 %s263, 1
          %s1628 = scalar_lea.vmem [#allocation4], %s1627
          %1629 = dma.done %s1626, 16
        $region148: #{tpu_custom_call.1} parent=143 // pred_fallthru
          _
      $region144: #{tpu_custom_call.1} parent=5 // pred_fallthru
        _
    $region6: #{tpu_custom_call.1} parent=1 // loop_footer
      %s23 = sadd.s32 1, %s19
    $region7: #{tpu_custom_call.1} parent=1 // loop_footer_branch
      %18 = sbr.rel target = $region3
    $region8: #{tpu_custom_call.1} parent=1 // loop_exit
      _
    %1630 = vsyncpa [#allocation5], 1
    %s1631 = scalar_lea.sflag [#allocation5], 1
    %1632 = vsyncpa %s1631, 1

</llo_original>
